<compile_context>
chip_gen: v5e
topology: v5e:2x2
jax: 0.10.0
libtpu: 0.0.40
codegen_flags: <defaults>
</compile_context>

<pallas_src>
import functools

import jax
import jax.numpy as jnp
from jax.experimental import pallas as pl
from jax.experimental.pallas import tpu as pltpu


# ------------------------------ small helpers ------------------------------- #

def _round_up(x, m):
    return (x + m - 1) // m * m


def _pad_to(a, rows, cols, dtype=None):
    dtype = dtype or a.dtype
    out = jnp.zeros((rows, cols), dtype)
    return out.at[: a.shape[0], : a.shape[1]].set(a.astype(dtype))


# ----------------------------- Pallas kernels ------------------------------- #

def _gcn_layer_kernel(a_ref, r_ref, dinv_ref, w_ref, b_ref, o_ref, acc_ref, *,
                      apply_relu, scale_rows_out):
    """One GCN layer tile:  out_i = act((dinv_i * sum_k (A+I)[i,k] @ R[k]) @ W + b).

    a_ref    : [tm, tk]  bf16   tile of (A + I)           (streamed over k)
    r_ref    : [tk, Fr]  bf16   row-block of the (already dinv-scaled) right operand
    dinv_ref : [tm, 1]   f32    D^{-1/2} for the current row block
    w_ref    : [Fr, Fo]  f32    weights (pinned in VMEM, constant index map)
    b_ref    : [1, Fo]   f32    bias    (pinned)
    o_ref    : [tm, Fo]         output row block (written at last k)
    acc_ref  : [tm, Fr]  f32    accumulator scratch
    """
    k = pl.program_id(1)

    @pl.when(k == 0)
    def _init():
        acc_ref[...] = jnp.zeros_like(acc_ref)

    # bf16 x bf16 -> f32 accumulate on the MXU.
    acc_ref[...] += jnp.dot(a_ref[...], r_ref[...],
                            preferred_element_type=jnp.float32)

    @pl.when(k == pl.num_programs(1) - 1)
    def _finalize():
        dinv = dinv_ref[...]                                   # [tm, 1]
        h = jnp.dot(dinv * acc_ref[...], w_ref[...],
                    preferred_element_type=jnp.float32)        # [tm, Fo]
        h = h + b_ref[...]
        if apply_relu:
            h = jnp.maximum(h, 0.0)
        if scale_rows_out:
            # Pre-scale rows by dinv so the result is directly the next layer's
            # right operand (dinv ⊙ H) -- keeps normalization inside the kernel.
            h = h * dinv
        o_ref[...] = h.astype(o_ref.dtype)


def _decode_kernel(zi_ref, zj_ref, sni_ref, snj_ref, o_ref, mvec_ref, *, n, tm, tn):
    """Pairwise-distance decoder, grid = (phase, i, j).

    phase 0: running max of masked distances into mvec_ref (VMEM [1, tn]).
    phase 1: recompute the distance tile and write 1 - d * (1/max).
    Squared norms are passed as precomputed row/column vectors -> no per-tile
    transpose; the Gram term contracts the feature axis of both operands directly.
    """
    l = pl.program_id(0)
    i = pl.program_id(1)
    j = pl.program_id(2)

    zi = zi_ref[...]                                           # [tm, D] f32
    zj = zj_ref[...]                                           # [tn, D] f32
    gram = jax.lax.dot_general(zi, zj,
                               dimension_numbers=(((1,), (1,)), ((), ())),
                               preferred_element_type=jnp.float32)  # [tm, tn]
    d2 = sni_ref[...] + snj_ref[...] - 2.0 * gram
    d = jnp.sqrt(jnp.maximum(d2, 0.0))                         # torch.cdist(p=2)

    @pl.when(jnp.logical_and(l == 0, jnp.logical_and(i == 0, j == 0)))
    def _init():
        mvec_ref[...] = jnp.zeros_like(mvec_ref)

    @pl.when(l == 0)
    def _max_pass():
        # Mask out padded rows/cols so they cannot contaminate the global max.
        row = i * tm + jax.lax.broadcasted_iota(jnp.int32, (tm, tn), 0)
        col = j * tn + jax.lax.broadcasted_iota(jnp.int32, (tm, tn), 1)
        valid = jnp.logical_and(row < n, col < n)
        dm = jnp.where(valid, d, 0.0)
        mvec_ref[...] = jnp.maximum(mvec_ref[...],
                                    jnp.max(dm, axis=0, keepdims=True))

    @pl.when(l == 1)
    def _write_pass():
        m = jnp.max(mvec_ref[...])
        scale = jnp.where(m > 0.0, 1.0 / m, 1.0)   # max_diff != 0 else 1
        o_ref[...] = (1.0 - d * scale).astype(o_ref.dtype)


# -------------------------------- wrappers ----------------------------------- #

def gcn_layer(a_pad, r, dinv_pad, w, b, *, apply_relu, scale_rows_out,
              out_dtype, tm, tk):
    n_pad = a_pad.shape[0]
    fr = r.shape[1]
    fo = w.shape[1]
    ni, nk = n_pad // tm, n_pad // tk
    return pl.pallas_call(
        functools.partial(_gcn_layer_kernel, apply_relu=apply_relu,
                          scale_rows_out=scale_rows_out),
        out_shape=jax.ShapeDtypeStruct((n_pad, fo), out_dtype),
        grid_spec=pltpu.PrefetchScalarGridSpec(
            num_scalar_prefetch=0,
            grid=(ni, nk),
            in_specs=[
                pl.BlockSpec((tm, tk), lambda i, k: (i, k)),       # (A+I) tile, bf16
                pl.BlockSpec((tk, fr), lambda i, k: (k, 0)),       # R row-block, bf16
                pl.BlockSpec((tm, 1), lambda i, k: (i, 0)),        # dinv rows, f32
                pl.BlockSpec((fr, fo), lambda i, k: (0, 0)),       # W (pinned)
                pl.BlockSpec((1, fo), lambda i, k: (0, 0)),        # b (pinned)
            ],
            out_specs=pl.BlockSpec((tm, fo), lambda i, k: (i, 0)),
            scratch_shapes=[pltpu.VMEM((tm, fr), jnp.float32)],
        ),
        compiler_params=pltpu.CompilerParams(
            dimension_semantics=("parallel", "arbitrary"),
            vmem_limit_bytes=32 * 1024 * 1024,
        ),
    )(a_pad, r, dinv_pad, w, b)


def decode(z_pad, n, *, tm, tn):
    n_pad, d = z_pad.shape
    sn = jnp.sum(z_pad * z_pad, axis=1)            # tiny O(N*D) glue
    sn_col = sn[:, None]                           # [N_pad, 1]
    sn_row = sn[None, :]                           # [1, N_pad]
    ni, nj = n_pad // tm, n_pad // tn
    return pl.pallas_call(
        functools.partial(_decode_kernel, n=n, tm=tm, tn=tn),
        out_shape=jax.ShapeDtypeStruct((n_pad, n_pad), jnp.float32),
        grid_spec=pltpu.PrefetchScalarGridSpec(
            num_scalar_prefetch=0,
            grid=(2, ni, nj),
            in_specs=[
                pl.BlockSpec((tm, d), lambda l, i, j: (i, 0)),
                pl.BlockSpec((tn, d), lambda l, i, j: (j, 0)),
                pl.BlockSpec((tm, 1), lambda l, i, j: (i, 0)),
                pl.BlockSpec((1, tn), lambda l, i, j: (0, j)),
            ],
            # During the max phase (l == 0) all steps map to block (0, 0) and the
            # kernel never writes it, so no N^2 garbage writeback happens; every
            # (i, j) block is written exactly once in phase 1.
            out_specs=pl.BlockSpec((tm, tn), lambda l, i, j: (i * l, j * l)),
            scratch_shapes=[pltpu.VMEM((1, tn), jnp.float32)],
        ),
        compiler_params=pltpu.CompilerParams(
            dimension_semantics=("arbitrary", "arbitrary", "arbitrary"),
            vmem_limit_bytes=32 * 1024 * 1024,
        ),
    )(z_pad, z_pad, sn_col, sn_row)


def build_graph_operands(edge_index, num_nodes, n_pad):
    """Dense (A + I) (binary, self-loops added idempotently) and dinv = deg^{-1/2}.

    Assumption: binary adjacency; duplicate edges collapse to weight 1. Existing
    self-loops are kept at weight 1 (matching add_remaining_self_loops).
    """
    src, dst = edge_index[0], edge_index[1]
    a = jnp.zeros((num_nodes, num_nodes), jnp.float32)
    a = a.at[dst, src].set(1.0)                               # message flows src -> dst
    a = jnp.maximum(a, jnp.eye(num_nodes, dtype=jnp.float32))  # add self-loops (idempotent)
    deg = jnp.sum(a, axis=1)
    dinv = jnp.where(deg > 0, 1.0 / jnp.sqrt(deg), 0.0)
    # 0/1 entries are exact in bf16; normalization stays f32 inside the kernel.
    a_pad = _pad_to(a, n_pad, n_pad, jnp.bfloat16)
    dinv_pad = _pad_to(dinv[:, None], n_pad, 1, jnp.float32)
    return a_pad, dinv_pad


def graph_auto_encoder_forward(x, edge_index, params):
    n, fin = x.shape
    hid = params["w1"].shape[1]
    out = params["w2"].shape[1]

    n_pad = _round_up(n, 128)
    tile = 256 if n_pad % 256 == 0 else 128          # <=256: fits v7x 64 MiB VMEM easily
    fin_p, hid_p, out_p = (_round_up(d, 128) for d in (fin, hid, out))

    a_pad, dinv_pad = build_graph_operands(edge_index, n, n_pad)
    dinv_n = dinv_pad[:n]                                     # [n, 1]

    # Right operand of layer 1 is dinv ⊙ X (tiny O(N*Fin) glue), streamed as bf16.
    xs = _pad_to(x * dinv_n, n_pad, fin_p, jnp.bfloat16)

    w1p = _pad_to(params["w1"], fin_p, hid_p, jnp.float32)
    b1p = _pad_to(params["b1"][None, :], 1, hid_p, jnp.float32)
    w2p = _pad_to(params["w2"], hid_p, out_p, jnp.float32)
    b2p = _pad_to(params["b2"][None, :], 1, out_p, jnp.float32)

    # Layer 1: emits dinv ⊙ relu(A_hat X W1 + b1) in bf16 -> directly layer 2's input.
    r2 = gcn_layer(a_pad, xs, dinv_pad, w1p, b1p,
                   apply_relu=True, scale_rows_out=True,
                   out_dtype=jnp.bfloat16, tm=tile, tk=tile)
    # Layer 2: Z = A_hat H W2 + b2 (f32 output for the decoder).
    z_pad = gcn_layer(a_pad, r2, dinv_pad, w2p, b2p,
                      apply_relu=False, scale_rows_out=False,
                      out_dtype=jnp.float32, tm=tile, tk=tile)

    adj_pad = decode(z_pad, n, tm=tile, tn=tile)
    return adj_pad[:n, :n]


# ------------------------------ init / reference ----------------------------- #

def init_params(key, input_dim, hidden_dim, output_dim):
    k1, k2 = jax.random.split(key)

    def glorot(k, fan_in, fan_out):
        limit = jnp.sqrt(6.0 / (fan_in + fan_out))
        return jax.random.uniform(k, (fan_in, fan_out), jnp.float32, -limit, limit)

    return {
        "w1": glorot(k1, input_dim, hidden_dim),
        "b1": jnp.zeros((hidden_dim,), jnp.float32),
        "w2": glorot(k2, hidden_dim, output_dim),
        "b2": jnp.zeros((output_dim,), jnp.float32),
    }


def reference_forward(x, edge_index, params):
    n = x.shape[0]
    src, dst = edge_index[0], edge_index[1]
    a = jnp.zeros((n, n), jnp.float32).at[dst, src].set(1.0)
    a = jnp.maximum(a, jnp.eye(n, dtype=jnp.float32))
    deg = jnp.sum(a, axis=1)
    dinv = jnp.where(deg > 0, 1.0 / jnp.sqrt(deg), 0.0)
    a_hat = dinv[:, None] * a * dinv[None, :]
    h = jax.nn.relu(a_hat @ x @ params["w1"] + params["b1"])
    z = a_hat @ h @ params["w2"] + params["b2"]
    sq = jnp.sum(z * z, axis=1)
    d = jnp.sqrt(jnp.maximum(sq[:, None] + sq[None, :] - 2.0 * (z @ z.T), 0.0))
    m = jnp.max(d)
    m = jnp.where(m == 0.0, 1.0, m)
    return 1.0 - d / m


# ----------------------------------- main ------------------------------------ #

if __name__ == "__main__":
    key = jax.random.PRNGKey(0)
    num_nodes, input_dim, hidden_dim, output_dim = 16, 8, 32, 16

    kx, kp = jax.random.split(key)
    x = jax.random.normal(kx, (num_nodes, input_dim), jnp.float32)

    # Deterministic ring graph (undirected: both directions listed).
    src = jnp.arange(num_nodes, dtype=jnp.int32)
    dst = (src + 1) % num_nodes
    edge_index = jnp.stack([jnp.concatenate([src, dst]),
                            jnp.concatenate([dst, src])], axis=0)  # [2, 2N]

    params = init_params(kp, input_dim, hidden_dim, output_dim)

    adj_hat = jax.jit(graph_auto_encoder_forward)(x, edge_index, params)
    adj_hat = jax.block_until_ready(adj_hat)

    ref = reference_forward(x, edge_index, params)

    assert adj_hat.shape == (num_nodes, num_nodes)
    assert bool(jnp.all(jnp.isfinite(adj_hat)))
    # bf16 streaming of A / hidden activations -> loose tolerance vs. f32 reference.
    assert float(jnp.max(jnp.abs(adj_hat - ref))) < 0.15
    print("KERNEL_OK")
</pallas_src>

<mosaic_0001>
module attributes {stable_mosaic.version = 11 : i64} {
  func.func @_gcn_layer_kernel(%arg0: i32, %arg1: i32, %arg2: memref<128x128xbf16, #tpu.memory_space<vmem>>, %arg3: memref<128x128xbf16, #tpu.memory_space<vmem>>, %arg4: memref<128x1xf32, #tpu.memory_space<vmem>>, %arg5: memref<128x128xf32, #tpu.memory_space<vmem>>, %arg6: memref<1x128xf32, #tpu.memory_space<vmem>>, %arg7: memref<128x128xbf16, #tpu.memory_space<vmem>>, %arg8: memref<128x128xf32, #tpu.memory_space<vmem>>) attributes {dimension_semantics = [#tpu.dimension_semantics<parallel>, #tpu.dimension_semantics<arbitrary>], iteration_bounds = array<i64: 1, 1>, scalar_prefetch = 0 : i64, scratch_operands = 1 : i64, tpu.core_type = #tpu.core_type<tc>, window_params = [{transform_indices = @transform_0, window_bounds = array<i64: 128, 128>}, {transform_indices = @transform_1, window_bounds = array<i64: 128, 128>}, {transform_indices = @transform_2, window_bounds = array<i64: 128, 1>}, {pipeline_mode = #tpu.pipeline_mode<synchronous>, transform_indices = @transform_3, window_bounds = array<i64: 128, 128>}, {pipeline_mode = #tpu.pipeline_mode<synchronous>, transform_indices = @transform_4, window_bounds = array<i64: 1, 128>}, {transform_indices = @transform_5, window_bounds = array<i64: 128, 128>}]} {
    %c0_i32 = arith.constant 0 : i32
    %0 = arith.cmpi eq, %arg1, %c0_i32 : i32
    %1 = arith.extui %0 : i1 to i32
    %c0_i32_0 = arith.constant 0 : i32
    %2 = arith.cmpi ne, %1, %c0_i32_0 : i32
    scf.if %2 {
      %cst_10 = arith.constant 0.000000e+00 : f32
      %12 = vector.broadcast %cst_10 : f32 to vector<128x128xf32>
      %c0_11 = arith.constant 0 : index
      %c0_12 = arith.constant 0 : index
      %13 = vector.load %arg8[%c0_11, %c0_12] : memref<128x128xf32, #tpu.memory_space<vmem>>, vector<128x128xf32>
      tpu.vector_store %arg8[%c0_11, %c0_12], %12 {strides = array<i32>} : memref<128x128xf32, #tpu.memory_space<vmem>>, vector<128x128xf32>,
    } else {
    }
    %c0 = arith.constant 0 : index
    %c0_1 = arith.constant 0 : index
    %3 = vector.load %arg8[%c0, %c0_1] : memref<128x128xf32, #tpu.memory_space<vmem>>, vector<128x128xf32>
    %c0_2 = arith.constant 0 : index
    %c0_3 = arith.constant 0 : index
    %4 = vector.load %arg2[%c0_2, %c0_3] : memref<128x128xbf16, #tpu.memory_space<vmem>>, vector<128x128xbf16>
    %c0_4 = arith.constant 0 : index
    %c0_5 = arith.constant 0 : index
    %5 = vector.load %arg3[%c0_4, %c0_5] : memref<128x128xbf16, #tpu.memory_space<vmem>>, vector<128x128xbf16>
    %cst = arith.constant dense<0.000000e+00> : vector<128x128xf32>
    %6 = tpu.matmul %4, %5, %cst {dimension_numbers = #tpu.dot_dimension_numbers<[1], [0], [0], [1], [0, 0, 1, 1], [], []>} : vector<128x128xbf16>, vector<128x128xbf16>, vector<128x128xf32> -> vector<128x128xf32>
    %7 = arith.addf %3, %6 : vector<128x128xf32>
    %c0_6 = arith.constant 0 : index
    %c0_7 = arith.constant 0 : index
    %8 = vector.load %arg8[%c0_6, %c0_7] : memref<128x128xf32, #tpu.memory_space<vmem>>, vector<128x128xf32>
    tpu.vector_store %arg8[%c0_6, %c0_7], %7 {strides = array<i32>} : memref<128x128xf32, #tpu.memory_space<vmem>>, vector<128x128xf32>,
    %c0_i32_8 = arith.constant 0 : i32
    %9 = arith.cmpi eq, %arg1, %c0_i32_8 : i32
    %10 = arith.extui %9 : i1 to i32
    %c0_i32_9 = arith.constant 0 : i32
    %11 = arith.cmpi ne, %10, %c0_i32_9 : i32
    scf.if %11 {
      %c0_10 = arith.constant 0 : index
      %c0_11 = arith.constant 0 : index
      %12 = vector.load %arg4[%c0_10, %c0_11] : memref<128x1xf32, #tpu.memory_space<vmem>>, vector<128x1xf32>
      %c0_12 = arith.constant 0 : index
      %c0_13 = arith.constant 0 : index
      %13 = vector.load %arg8[%c0_12, %c0_13] : memref<128x128xf32, #tpu.memory_space<vmem>>, vector<128x128xf32>
      %14 = vector.broadcast %12 : vector<128x1xf32> to vector<128x128xf32>
      %15 = arith.mulf %14, %13 : vector<128x128xf32>
      %c0_14 = arith.constant 0 : index
      %c0_15 = arith.constant 0 : index
      %16 = vector.load %arg5[%c0_14, %c0_15] : memref<128x128xf32, #tpu.memory_space<vmem>>, vector<128x128xf32>
      %cst_16 = arith.constant dense<0.000000e+00> : vector<128x128xf32>
      %17 = tpu.matmul %15, %16, %cst_16 {dimension_numbers = #tpu.dot_dimension_numbers<[1], [0], [0], [1], [0, 0, 1, 1], [], []>} : vector<128x128xf32>, vector<128x128xf32>, vector<128x128xf32> -> vector<128x128xf32>
      %c0_17 = arith.constant 0 : index
      %c0_18 = arith.constant 0 : index
      %18 = vector.load %arg6[%c0_17, %c0_18] : memref<1x128xf32, #tpu.memory_space<vmem>>, vector<1x128xf32>
      %19 = vector.broadcast %18 : vector<1x128xf32> to vector<128x128xf32>
      %20 = arith.addf %17, %19 : vector<128x128xf32>
      %cst_19 = arith.constant 0.000000e+00 : f32
      %21 = vector.broadcast %cst_19 : f32 to vector<128x128xf32>
      %22 = arith.maximumf %20, %21 : vector<128x128xf32>
      %23 = vector.broadcast %12 : vector<128x1xf32> to vector<128x128xf32>
      %24 = arith.mulf %22, %23 : vector<128x128xf32>
      %25 = arith.truncf %24 : vector<128x128xf32> to vector<128x128xbf16>
      %c0_20 = arith.constant 0 : index
      %c0_21 = arith.constant 0 : index
      %26 = vector.load %arg7[%c0_20, %c0_21] : memref<128x128xbf16, #tpu.memory_space<vmem>>, vector<128x128xbf16>
      tpu.vector_store %arg7[%c0_20, %c0_21], %25 {strides = array<i32>} : memref<128x128xbf16, #tpu.memory_space<vmem>>, vector<128x128xbf16>,
    } else {
    }
    return
  }
  func.func @transform_0(%arg0: i32, %arg1: i32) -> (i32, i32) {
    %c0_i32 = arith.constant 0 : i32
    return %arg0, %arg1 : i32, i32
  }
  func.func @transform_1(%arg0: i32, %arg1: i32) -> (i32, i32) {
    %c0_i32 = arith.constant 0 : i32
    %c0_i32_0 = arith.constant 0 : i32
    return %arg1, %c0_i32 : i32, i32
  }
  func.func @transform_2(%arg0: i32, %arg1: i32) -> (i32, i32) {
    %c0_i32 = arith.constant 0 : i32
    %c0_i32_0 = arith.constant 0 : i32
    return %arg0, %c0_i32 : i32, i32
  }
  func.func @transform_3(%arg0: i32, %arg1: i32) -> (i32, i32) {
    %c0_i32 = arith.constant 0 : i32
    %c0_i32_0 = arith.constant 0 : i32
    %c0_i32_1 = arith.constant 0 : i32
    return %c0_i32, %c0_i32_0 : i32, i32
  }
  func.func @transform_4(%arg0: i32, %arg1: i32) -> (i32, i32) {
    %c0_i32 = arith.constant 0 : i32
    %c0_i32_0 = arith.constant 0 : i32
    %c0_i32_1 = arith.constant 0 : i32
    return %c0_i32, %c0_i32_0 : i32, i32
  }
  func.func @transform_5(%arg0: i32, %arg1: i32) -> (i32, i32) {
    %c0_i32 = arith.constant 0 : i32
    %c0_i32_0 = arith.constant 0 : i32
    return %arg0, %c0_i32 : i32, i32
  }
}

module attributes {stable_mosaic.version = 11 : i64} {
  func.func @_gcn_layer_kernel(%arg0: i32, %arg1: i32, %arg2: memref<128x128xbf16, #tpu.memory_space<vmem>>, %arg3: memref<128x128xbf16, #tpu.memory_space<vmem>>, %arg4: memref<128x1xf32, #tpu.memory_space<vmem>>, %arg5: memref<128x128xf32, #tpu.memory_space<vmem>>, %arg6: memref<1x128xf32, #tpu.memory_space<vmem>>, %arg7: memref<128x128xf32, #tpu.memory_space<vmem>>, %arg8: memref<128x128xf32, #tpu.memory_space<vmem>>) attributes {dimension_semantics = [#tpu.dimension_semantics<parallel>, #tpu.dimension_semantics<arbitrary>], iteration_bounds = array<i64: 1, 1>, scalar_prefetch = 0 : i64, scratch_operands = 1 : i64, tpu.core_type = #tpu.core_type<tc>, window_params = [{transform_indices = @transform_0, window_bounds = array<i64: 128, 128>}, {transform_indices = @transform_1, window_bounds = array<i64: 128, 128>}, {transform_indices = @transform_2, window_bounds = array<i64: 128, 1>}, {pipeline_mode = #tpu.pipeline_mode<synchronous>, transform_indices = @transform_3, window_bounds = array<i64: 128, 128>}, {pipeline_mode = #tpu.pipeline_mode<synchronous>, transform_indices = @transform_4, window_bounds = array<i64: 1, 128>}, {transform_indices = @transform_5, window_bounds = array<i64: 128, 128>}]} {
    %c0_i32 = arith.constant 0 : i32
    %0 = arith.cmpi eq, %arg1, %c0_i32 : i32
    %1 = arith.extui %0 : i1 to i32
    %c0_i32_0 = arith.constant 0 : i32
    %2 = arith.cmpi ne, %1, %c0_i32_0 : i32
    scf.if %2 {
      %cst_10 = arith.constant 0.000000e+00 : f32
      %12 = vector.broadcast %cst_10 : f32 to vector<128x128xf32>
      %c0_11 = arith.constant 0 : index
      %c0_12 = arith.constant 0 : index
      %13 = vector.load %arg8[%c0_11, %c0_12] : memref<128x128xf32, #tpu.memory_space<vmem>>, vector<128x128xf32>
      tpu.vector_store %arg8[%c0_11, %c0_12], %12 {strides = array<i32>} : memref<128x128xf32, #tpu.memory_space<vmem>>, vector<128x128xf32>,
    } else {
    }
    %c0 = arith.constant 0 : index
    %c0_1 = arith.constant 0 : index
    %3 = vector.load %arg8[%c0, %c0_1] : memref<128x128xf32, #tpu.memory_space<vmem>>, vector<128x128xf32>
    %c0_2 = arith.constant 0 : index
    %c0_3 = arith.constant 0 : index
    %4 = vector.load %arg2[%c0_2, %c0_3] : memref<128x128xbf16, #tpu.memory_space<vmem>>, vector<128x128xbf16>
    %c0_4 = arith.constant 0 : index
    %c0_5 = arith.constant 0 : index
    %5 = vector.load %arg3[%c0_4, %c0_5] : memref<128x128xbf16, #tpu.memory_space<vmem>>, vector<128x128xbf16>
    %cst = arith.constant dense<0.000000e+00> : vector<128x128xf32>
    %6 = tpu.matmul %4, %5, %cst {dimension_numbers = #tpu.dot_dimension_numbers<[1], [0], [0], [1], [0, 0, 1, 1], [], []>} : vector<128x128xbf16>, vector<128x128xbf16>, vector<128x128xf32> -> vector<128x128xf32>
    %7 = arith.addf %3, %6 : vector<128x128xf32>
    %c0_6 = arith.constant 0 : index
    %c0_7 = arith.constant 0 : index
    %8 = vector.load %arg8[%c0_6, %c0_7] : memref<128x128xf32, #tpu.memory_space<vmem>>, vector<128x128xf32>
    tpu.vector_store %arg8[%c0_6, %c0_7], %7 {strides = array<i32>} : memref<128x128xf32, #tpu.memory_space<vmem>>, vector<128x128xf32>,
    %c0_i32_8 = arith.constant 0 : i32
    %9 = arith.cmpi eq, %arg1, %c0_i32_8 : i32
    %10 = arith.extui %9 : i1 to i32
    %c0_i32_9 = arith.constant 0 : i32
    %11 = arith.cmpi ne, %10, %c0_i32_9 : i32
    scf.if %11 {
      %c0_10 = arith.constant 0 : index
      %c0_11 = arith.constant 0 : index
      %12 = vector.load %arg4[%c0_10, %c0_11] : memref<128x1xf32, #tpu.memory_space<vmem>>, vector<128x1xf32>
      %c0_12 = arith.constant 0 : index
      %c0_13 = arith.constant 0 : index
      %13 = vector.load %arg8[%c0_12, %c0_13] : memref<128x128xf32, #tpu.memory_space<vmem>>, vector<128x128xf32>
      %14 = vector.broadcast %12 : vector<128x1xf32> to vector<128x128xf32>
      %15 = arith.mulf %14, %13 : vector<128x128xf32>
      %c0_14 = arith.constant 0 : index
      %c0_15 = arith.constant 0 : index
      %16 = vector.load %arg5[%c0_14, %c0_15] : memref<128x128xf32, #tpu.memory_space<vmem>>, vector<128x128xf32>
      %cst_16 = arith.constant dense<0.000000e+00> : vector<128x128xf32>
      %17 = tpu.matmul %15, %16, %cst_16 {dimension_numbers = #tpu.dot_dimension_numbers<[1], [0], [0], [1], [0, 0, 1, 1], [], []>} : vector<128x128xf32>, vector<128x128xf32>, vector<128x128xf32> -> vector<128x128xf32>
      %c0_17 = arith.constant 0 : index
      %c0_18 = arith.constant 0 : index
      %18 = vector.load %arg6[%c0_17, %c0_18] : memref<1x128xf32, #tpu.memory_space<vmem>>, vector<1x128xf32>
      %19 = vector.broadcast %18 : vector<1x128xf32> to vector<128x128xf32>
      %20 = arith.addf %17, %19 : vector<128x128xf32>
      %c0_19 = arith.constant 0 : index
      %c0_20 = arith.constant 0 : index
      %21 = vector.load %arg7[%c0_19, %c0_20] : memref<128x128xf32, #tpu.memory_space<vmem>>, vector<128x128xf32>
      tpu.vector_store %arg7[%c0_19, %c0_20], %20 {strides = array<i32>} : memref<128x128xf32, #tpu.memory_space<vmem>>, vector<128x128xf32>,
    } else {
    }
    return
  }
  func.func @transform_0(%arg0: i32, %arg1: i32) -> (i32, i32) {
    %c0_i32 = arith.constant 0 : i32
    return %arg0, %arg1 : i32, i32
  }
  func.func @transform_1(%arg0: i32, %arg1: i32) -> (i32, i32) {
    %c0_i32 = arith.constant 0 : i32
    %c0_i32_0 = arith.constant 0 : i32
    return %arg1, %c0_i32 : i32, i32
  }
  func.func @transform_2(%arg0: i32, %arg1: i32) -> (i32, i32) {
    %c0_i32 = arith.constant 0 : i32
    %c0_i32_0 = arith.constant 0 : i32
    return %arg0, %c0_i32 : i32, i32
  }
  func.func @transform_3(%arg0: i32, %arg1: i32) -> (i32, i32) {
    %c0_i32 = arith.constant 0 : i32
    %c0_i32_0 = arith.constant 0 : i32
    %c0_i32_1 = arith.constant 0 : i32
    return %c0_i32, %c0_i32_0 : i32, i32
  }
  func.func @transform_4(%arg0: i32, %arg1: i32) -> (i32, i32) {
    %c0_i32 = arith.constant 0 : i32
    %c0_i32_0 = arith.constant 0 : i32
    %c0_i32_1 = arith.constant 0 : i32
    return %c0_i32, %c0_i32_0 : i32, i32
  }
  func.func @transform_5(%arg0: i32, %arg1: i32) -> (i32, i32) {
    %c0_i32 = arith.constant 0 : i32
    %c0_i32_0 = arith.constant 0 : i32
    return %arg0, %c0_i32 : i32, i32
  }
}

module attributes {stable_mosaic.version = 11 : i64} {
  func.func @_decode_kernel(%arg0: i32, %arg1: i32, %arg2: i32, %arg3: memref<128x128xf32, #tpu.memory_space<vmem>>, %arg4: memref<128x128xf32, #tpu.memory_space<vmem>>, %arg5: memref<128x1xf32, #tpu.memory_space<vmem>>, %arg6: memref<1x128xf32, #tpu.memory_space<vmem>>, %arg7: memref<128x128xf32, #tpu.memory_space<vmem>>, %arg8: memref<1x128xf32, #tpu.memory_space<vmem>>) attributes {dimension_semantics = [#tpu.dimension_semantics<arbitrary>, #tpu.dimension_semantics<arbitrary>, #tpu.dimension_semantics<arbitrary>], iteration_bounds = array<i64: 2, 1, 1>, scalar_prefetch = 0 : i64, scratch_operands = 1 : i64, tpu.core_type = #tpu.core_type<tc>, window_params = [{transform_indices = @transform_0, window_bounds = array<i64: 128, 128>}, {transform_indices = @transform_1, window_bounds = array<i64: 128, 128>}, {transform_indices = @transform_2, window_bounds = array<i64: 128, 1>}, {transform_indices = @transform_3, window_bounds = array<i64: 1, 128>}, {transform_indices = @transform_4, window_bounds = array<i64: 128, 128>}]} {
    %c0 = arith.constant 0 : index
    %c0_0 = arith.constant 0 : index
    %0 = vector.load %arg3[%c0, %c0_0] : memref<128x128xf32, #tpu.memory_space<vmem>>, vector<128x128xf32>
    %c0_1 = arith.constant 0 : index
    %c0_2 = arith.constant 0 : index
    %1 = vector.load %arg4[%c0_1, %c0_2] : memref<128x128xf32, #tpu.memory_space<vmem>>, vector<128x128xf32>
    %cst = arith.constant dense<0.000000e+00> : vector<128x128xf32>
    %2 = tpu.matmul %0, %1, %cst {dimension_numbers = #tpu.dot_dimension_numbers<[1], [1], [0], [0], [0, 0, 1, 0], [], []>} : vector<128x128xf32>, vector<128x128xf32>, vector<128x128xf32> -> vector<128x128xf32>
    %c0_3 = arith.constant 0 : index
    %c0_4 = arith.constant 0 : index
    %3 = vector.load %arg5[%c0_3, %c0_4] : memref<128x1xf32, #tpu.memory_space<vmem>>, vector<128x1xf32>
    %c0_5 = arith.constant 0 : index
    %c0_6 = arith.constant 0 : index
    %4 = vector.load %arg6[%c0_5, %c0_6] : memref<1x128xf32, #tpu.memory_space<vmem>>, vector<1x128xf32>
    %5 = vector.broadcast %3 : vector<128x1xf32> to vector<128x128xf32>
    %6 = vector.broadcast %4 : vector<1x128xf32> to vector<128x128xf32>
    %7 = arith.addf %5, %6 : vector<128x128xf32>
    %cst_7 = arith.constant 2.000000e+00 : f32
    %8 = vector.broadcast %cst_7 : f32 to vector<128x128xf32>
    %9 = arith.mulf %8, %2 : vector<128x128xf32>
    %10 = arith.subf %7, %9 : vector<128x128xf32>
    %cst_8 = arith.constant 0.000000e+00 : f32
    %11 = vector.broadcast %cst_8 : f32 to vector<128x128xf32>
    %12 = arith.maximumf %10, %11 : vector<128x128xf32>
    %13 = math.sqrt %12 : vector<128x128xf32>
    %c0_i32 = arith.constant 0 : i32
    %14 = arith.cmpi eq, %arg0, %c0_i32 : i32
    %c0_i32_9 = arith.constant 0 : i32
    %15 = arith.cmpi eq, %arg1, %c0_i32_9 : i32
    %c0_i32_10 = arith.constant 0 : i32
    %16 = arith.cmpi eq, %arg2, %c0_i32_10 : i32
    %17 = arith.andi %15, %16 : i1
    %18 = arith.andi %14, %17 : i1
    %19 = arith.extui %18 : i1 to i32
    %c0_i32_11 = arith.constant 0 : i32
    %20 = arith.cmpi ne, %19, %c0_i32_11 : i32
    scf.if %20 {
      %cst_15 = arith.constant 0.000000e+00 : f32
      %27 = vector.broadcast %cst_15 : f32 to vector<1x128xf32>
      %c0_16 = arith.constant 0 : index
      %c0_17 = arith.constant 0 : index
      %28 = vector.load %arg8[%c0_16, %c0_17] : memref<1x128xf32, #tpu.memory_space<vmem>>, vector<1x128xf32>
      tpu.vector_store %arg8[%c0_16, %c0_17], %27 {strides = array<i32>} : memref<1x128xf32, #tpu.memory_space<vmem>>, vector<1x128xf32>,
    } else {
    }
    %c0_i32_12 = arith.constant 0 : i32
    %21 = arith.cmpi eq, %arg0, %c0_i32_12 : i32
    %22 = arith.extui %21 : i1 to i32
    %c0_i32_13 = arith.constant 0 : i32
    %23 = arith.cmpi ne, %22, %c0_i32_13 : i32
    scf.if %23 {
      %c128_i32 = arith.constant 128 : i32
      %27 = arith.muli %arg1, %c128_i32 : i32
      %28 = tpu.iota {dimensions = array<i32: 0>} : vector<128x128xi32>
      %29 = vector.broadcast %27 : i32 to vector<128x128xi32>
      %30 = arith.addi %29, %28 : vector<128x128xi32>
      %c128_i32_15 = arith.constant 128 : i32
      %31 = arith.muli %arg2, %c128_i32_15 : i32
      %32 = tpu.iota {dimensions = array<i32: 1>} : vector<128x128xi32>
      %33 = vector.broadcast %31 : i32 to vector<128x128xi32>
      %34 = arith.addi %33, %32 : vector<128x128xi32>
      %c16_i32 = arith.constant 16 : i32
      %35 = vector.broadcast %c16_i32 : i32 to vector<128x128xi32>
      %36 = arith.cmpi slt, %30, %35 : vector<128x128xi32>
      %c16_i32_16 = arith.constant 16 : i32
      %37 = vector.broadcast %c16_i32_16 : i32 to vector<128x128xi32>
      %38 = arith.cmpi slt, %34, %37 : vector<128x128xi32>
      %39 = arith.andi %36, %38 : vector<128x128xi1>
      %cst_17 = arith.constant 0.000000e+00 : f32
      %40 = vector.broadcast %cst_17 : f32 to vector<128x128xf32>
      %41 = arith.select %39, %13, %40 : vector<128x128xi1>, vector<128x128xf32>
      %c0_18 = arith.constant 0 : index
      %c0_19 = arith.constant 0 : index
      %42 = vector.load %arg8[%c0_18, %c0_19] : memref<1x128xf32, #tpu.memory_space<vmem>>, vector<1x128xf32>
      %cst_20 = arith.constant dense<0xFF800000> : vector<128xf32>
      %43 = vector.multi_reduction <maximumf>, %41, %cst_20 [0] : vector<128x128xf32> to vector<128xf32>
      %44 = vector.shape_cast %43 : vector<128xf32> to vector<1x128xf32>
      %45 = arith.maximumf %42, %44 : vector<1x128xf32>
      %c0_21 = arith.constant 0 : index
      %c0_22 = arith.constant 0 : index
      %46 = vector.load %arg8[%c0_21, %c0_22] : memref<1x128xf32, #tpu.memory_space<vmem>>, vector<1x128xf32>
      tpu.vector_store %arg8[%c0_21, %c0_22], %45 {strides = array<i32>} : memref<1x128xf32, #tpu.memory_space<vmem>>, vector<1x128xf32>,
    } else {
    }
    %c1_i32 = arith.constant 1 : i32
    %24 = arith.cmpi eq, %arg0, %c1_i32 : i32
    %25 = arith.extui %24 : i1 to i32
    %c0_i32_14 = arith.constant 0 : i32
    %26 = arith.cmpi ne, %25, %c0_i32_14 : i32
    scf.if %26 {
      %c0_15 = arith.constant 0 : index
      %c0_16 = arith.constant 0 : index
      %27 = vector.load %arg8[%c0_15, %c0_16] : memref<1x128xf32, #tpu.memory_space<vmem>>, vector<1x128xf32>
      %28 = vector.shape_cast %27 : vector<1x128xf32> to vector<1x1x128xf32>
      %cst_17 = arith.constant dense<0xFF800000> : vector<1xf32>
      %29 = vector.multi_reduction <maximumf>, %28, %cst_17 [1, 2] : vector<1x1x128xf32> to vector<1xf32>
      %30 = vector.shape_cast %29 : vector<1xf32> to vector<1x1x1xf32>
      %31 = vector.extract %30[0, 0, 0] : f32 from vector<1x1x1xf32>
      %cst_18 = arith.constant 0.000000e+00 : f32
      %32 = arith.cmpf ogt, %31, %cst_18 : f32
      %cst_19 = arith.constant 1.000000e+00 : f32
      %33 = arith.divf %cst_19, %31 : f32
      %cst_20 = arith.constant 1.000000e+00 : f32
      %34 = arith.select %32, %33, %cst_20 : f32
      %35 = vector.broadcast %34 : f32 to vector<128x128xf32>
      %36 = arith.mulf %13, %35 : vector<128x128xf32>
      %cst_21 = arith.constant 1.000000e+00 : f32
      %37 = vector.broadcast %cst_21 : f32 to vector<128x128xf32>
      %38 = arith.subf %37, %36 : vector<128x128xf32>
      %c0_22 = arith.constant 0 : index
      %c0_23 = arith.constant 0 : index
      %39 = vector.load %arg7[%c0_22, %c0_23] : memref<128x128xf32, #tpu.memory_space<vmem>>, vector<128x128xf32>
      tpu.vector_store %arg7[%c0_22, %c0_23], %38 {strides = array<i32>} : memref<128x128xf32, #tpu.memory_space<vmem>>, vector<128x128xf32>,
    } else {
    }
    return
  }
  func.func @transform_0(%arg0: i32, %arg1: i32, %arg2: i32) -> (i32, i32) {
    %c0_i32 = arith.constant 0 : i32
    %c0_i32_0 = arith.constant 0 : i32
    return %arg1, %c0_i32 : i32, i32
  }
  func.func @transform_1(%arg0: i32, %arg1: i32, %arg2: i32) -> (i32, i32) {
    %c0_i32 = arith.constant 0 : i32
    %c0_i32_0 = arith.constant 0 : i32
    return %arg2, %c0_i32 : i32, i32
  }
  func.func @transform_2(%arg0: i32, %arg1: i32, %arg2: i32) -> (i32, i32) {
    %c0_i32 = arith.constant 0 : i32
    %c0_i32_0 = arith.constant 0 : i32
    return %arg1, %c0_i32 : i32, i32
  }
  func.func @transform_3(%arg0: i32, %arg1: i32, %arg2: i32) -> (i32, i32) {
    %c0_i32 = arith.constant 0 : i32
    %c0_i32_0 = arith.constant 0 : i32
    return %c0_i32, %arg2 : i32, i32
  }
  func.func @transform_4(%arg0: i32, %arg1: i32, %arg2: i32) -> (i32, i32) {
    %0 = arith.muli %arg1, %arg0 : i32
    %1 = arith.muli %arg2, %arg0 : i32
    %c0_i32 = arith.constant 0 : i32
    return %0, %1 : i32, i32
  }
}

</mosaic_0001>

<llo_original>
// kernel: graph_auto_encoder_forward.3
$region0: #{graph_auto_encoder_forward.3}
  #allocation0 [shape = 'u32[]', space=smem, size = 0x4, offset = 0x4, fixed_abs, tag = 'smem constant byte address 0x4 - core index']
  #allocation1 [shape = 'u32[72,128]{1,0:T(1,128)}', space=vmem, size = 0x9000, scoped, tag = 'internal scratch']
  #allocation2 [shape = 'f32[128,128]{1,0:T(8,128)}', space=vmem, size = 0x10000, scoped, tag = 'scratch operand']
  %s0 = inlined_call_operand.vmem [shape: bf16[128,128], index: 0, kind: input, shape index: {}]
  %s1 = inlined_call_operand.vmem [shape: bf16[128,128], index: 1, kind: input, shape index: {}]
  %s2 = inlined_call_operand.vmem [shape: f32[128,1], index: 2, kind: input, shape index: {}]
  %s3 = inlined_call_operand.vmem [shape: f32[128,128], index: 3, kind: input, shape index: {}]
  %s4 = inlined_call_operand.vmem [shape: f32[1,128], index: 4, kind: input, shape index: {}]
  %s5 = inlined_call_operand.vmem [shape: bf16[128,128], index: 5, kind: output, shape index: {}]
  %s6 = sld [smem:[#allocation0]]
  $region38: #{graph_auto_encoder_forward.3} parent=0
    _
  %s8 = ssub.s32 1, %s6
  %s9 = scalar_select 0, %s8, %s6
  // Predicated region
  $region2: #{graph_auto_encoder_forward.3} parent=0 // pred_check
    _
  $region3: #{graph_auto_encoder_forward.3} parent=0 // pred_check_branch
    %11 = sbr.rel (0) target = $region5
  $region4: #{graph_auto_encoder_forward.3} parent=0 // pred_region
    _
  $region5: #{graph_auto_encoder_forward.3} parent=0 // pred_fallthru
    _
  // Predicated region
  $region6: #{graph_auto_encoder_forward.3} parent=0 // pred_check
    _
  $region7: #{graph_auto_encoder_forward.3} parent=0 // pred_check_branch
    %13 = sbr.rel (0) target = $region9
  $region8: #{graph_auto_encoder_forward.3} parent=0 // pred_region
    _
  $region9: #{graph_auto_encoder_forward.3} parent=0 // pred_fallthru
    _
  // Predicated region
  $region10: #{graph_auto_encoder_forward.3} parent=0 // pred_check
    _
  $region11: #{graph_auto_encoder_forward.3} parent=0 // pred_check_branch
    %15 = sbr.rel (0) target = $region13
  $region12: #{graph_auto_encoder_forward.3} parent=0 // pred_region
    _
  $region13: #{graph_auto_encoder_forward.3} parent=0 // pred_fallthru
    _
  // Predicated region
  $region14: #{graph_auto_encoder_forward.3} parent=0 // pred_check
    _
  $region15: #{graph_auto_encoder_forward.3} parent=0 // pred_check_branch
    %17 = sbr.rel (0) target = $region17
  $region16: #{graph_auto_encoder_forward.3} parent=0 // pred_region
    _
  $region17: #{graph_auto_encoder_forward.3} parent=0 // pred_fallthru
    _
  // Predicated region
  $region18: #{graph_auto_encoder_forward.3} parent=0 // pred_check
    _
  $region19: #{graph_auto_encoder_forward.3} parent=0 // pred_check_branch
    %19 = sbr.rel (0) target = $region21
  $region20: #{graph_auto_encoder_forward.3} parent=0 // pred_region
    _
  $region21: #{graph_auto_encoder_forward.3} parent=0 // pred_fallthru
    _
  %p20 = scmp.eq.s32.totalorder 0, 0
  // Predicated region
  $region22: #{graph_auto_encoder_forward.3} parent=0 // pred_check
    %p21 = pneg %p20
  $region23: #{graph_auto_encoder_forward.3} parent=0 // pred_check_branch
    %23 = sbr.rel (%p21) target = $region25
  $region24: #{graph_auto_encoder_forward.3} parent=0 // pred_region
    %24 = vst [vmem:[#allocation2] sm:$0xff] 0.0
    %25 = vst [vmem:[#allocation2 + $0x8] sm:$0xff] 0.0
    %26 = vst [vmem:[#allocation2 + $0x10] sm:$0xff] 0.0
    %27 = vst [vmem:[#allocation2 + $0x18] sm:$0xff] 0.0
    %28 = vst [vmem:[#allocation2 + $0x20] sm:$0xff] 0.0
    %29 = vst [vmem:[#allocation2 + $0x28] sm:$0xff] 0.0
    %30 = vst [vmem:[#allocation2 + $0x30] sm:$0xff] 0.0
    %31 = vst [vmem:[#allocation2 + $0x38] sm:$0xff] 0.0
    %32 = vst [vmem:[#allocation2 + $0x40] sm:$0xff] 0.0
    %33 = vst [vmem:[#allocation2 + $0x48] sm:$0xff] 0.0
    %34 = vst [vmem:[#allocation2 + $0x50] sm:$0xff] 0.0
    %35 = vst [vmem:[#allocation2 + $0x58] sm:$0xff] 0.0
    %36 = vst [vmem:[#allocation2 + $0x60] sm:$0xff] 0.0
    %37 = vst [vmem:[#allocation2 + $0x68] sm:$0xff] 0.0
    %38 = vst [vmem:[#allocation2 + $0x70] sm:$0xff] 0.0
    %39 = vst [vmem:[#allocation2 + $0x78] sm:$0xff] 0.0
  $region25: #{graph_auto_encoder_forward.3} parent=0 // pred_fallthru
    _
  %v40 = vld [vmem:[#allocation2] sm:$0xff]
  %v41 = vld [vmem:[#allocation2 + $0x8] sm:$0xff]
  %v42 = vld [vmem:[#allocation2 + $0x10] sm:$0xff]
  %v43 = vld [vmem:[#allocation2 + $0x18] sm:$0xff]
  %v44 = vld [vmem:[#allocation2 + $0x20] sm:$0xff]
  %v45 = vld [vmem:[#allocation2 + $0x28] sm:$0xff]
  %v46 = vld [vmem:[#allocation2 + $0x30] sm:$0xff]
  %v47 = vld [vmem:[#allocation2 + $0x38] sm:$0xff]
  %v48 = vld [vmem:[#allocation2 + $0x40] sm:$0xff]
  %v49 = vld [vmem:[#allocation2 + $0x48] sm:$0xff]
  %v50 = vld [vmem:[#allocation2 + $0x50] sm:$0xff]
  %v51 = vld [vmem:[#allocation2 + $0x58] sm:$0xff]
  %v52 = vld [vmem:[#allocation2 + $0x60] sm:$0xff]
  %v53 = vld [vmem:[#allocation2 + $0x68] sm:$0xff]
  %v54 = vld [vmem:[#allocation2 + $0x70] sm:$0xff]
  %v55 = vld [vmem:[#allocation2 + $0x78] sm:$0xff]
  %v56 = vld [vmem:[%s0] sm:$0xf]
  %v57 = vld [vmem:[%s0 + $0x4] sm:$0xf]
  %v58 = vld [vmem:[%s0 + $0x8] sm:$0xf]
  %v59 = vld [vmem:[%s0 + $0xc] sm:$0xf]
  %v60 = vld [vmem:[%s0 + $0x10] sm:$0xf]
  %v61 = vld [vmem:[%s0 + $0x14] sm:$0xf]
  %v62 = vld [vmem:[%s0 + $0x18] sm:$0xf]
  %v63 = vld [vmem:[%s0 + $0x1c] sm:$0xf]
  %v64 = vld [vmem:[%s0 + $0x20] sm:$0xf]
  %v65 = vld [vmem:[%s0 + $0x24] sm:$0xf]
  %v66 = vld [vmem:[%s0 + $0x28] sm:$0xf]
  %v67 = vld [vmem:[%s0 + $0x2c] sm:$0xf]
  %v68 = vld [vmem:[%s0 + $0x30] sm:$0xf]
  %v69 = vld [vmem:[%s0 + $0x34] sm:$0xf]
  %v70 = vld [vmem:[%s0 + $0x38] sm:$0xf]
  %v71 = vld [vmem:[%s0 + $0x3c] sm:$0xf]
  %v72 = vld [vmem:[%s1] sm:$0xf]
  %v73 = vld [vmem:[%s1 + $0x4] sm:$0xf]
  %v74 = vld [vmem:[%s1 + $0x8] sm:$0xf]
  %v75 = vld [vmem:[%s1 + $0xc] sm:$0xf]
  %v76 = vld [vmem:[%s1 + $0x10] sm:$0xf]
  %v77 = vld [vmem:[%s1 + $0x14] sm:$0xf]
  %v78 = vld [vmem:[%s1 + $0x18] sm:$0xf]
  %v79 = vld [vmem:[%s1 + $0x1c] sm:$0xf]
  %v80 = vld [vmem:[%s1 + $0x20] sm:$0xf]
  %v81 = vld [vmem:[%s1 + $0x24] sm:$0xf]
  %v82 = vld [vmem:[%s1 + $0x28] sm:$0xf]
  %v83 = vld [vmem:[%s1 + $0x2c] sm:$0xf]
  %v84 = vld [vmem:[%s1 + $0x30] sm:$0xf]
  %v85 = vld [vmem:[%s1 + $0x34] sm:$0xf]
  %v86 = vld [vmem:[%s1 + $0x38] sm:$0xf]
  %v87 = vld [vmem:[%s1 + $0x3c] sm:$0xf]
  %v104 = vunpack.c.l.b16 %v56
  %v105 = vunpack.c.l.b16 %v57
  %v106 = vunpack.c.l.b16 %v58
  %v107 = vunpack.c.l.b16 %v59
  %v108 = vunpack.c.l.b16 %v60
  %v109 = vunpack.c.l.b16 %v61
  %v110 = vunpack.c.l.b16 %v62
  %v111 = vunpack.c.l.b16 %v63
  %v112 = vunpack.c.l.b16 %v64
  %v113 = vunpack.c.l.b16 %v65
  %v114 = vunpack.c.l.b16 %v66
  %v115 = vunpack.c.l.b16 %v67
  %v116 = vunpack.c.l.b16 %v68
  %v117 = vunpack.c.l.b16 %v69
  %v118 = vunpack.c.l.b16 %v70
  %v119 = vunpack.c.l.b16 %v71
  %v120 = vpack.c.b16 %v105, %v104
  %v121 = vpack.c.b16 %v107, %v106
  %v122 = vpack.c.b16 %v109, %v108
  %v123 = vpack.c.b16 %v111, %v110
  %v124 = vpack.c.b16 %v113, %v112
  %v125 = vpack.c.b16 %v115, %v114
  %v126 = vpack.c.b16 %v117, %v116
  %v127 = vpack.c.b16 %v119, %v118
  %v152 = vunpack.c.l.b16 %v72
  %v153 = vunpack.c.l.b16 %v73
  %v154 = vunpack.c.l.b16 %v74
  %v155 = vunpack.c.l.b16 %v75
  %v156 = vunpack.c.l.b16 %v76
  %v157 = vunpack.c.l.b16 %v77
  %v158 = vunpack.c.l.b16 %v78
  %v159 = vunpack.c.l.b16 %v79
  %v160 = vunpack.c.l.b16 %v80
  %v161 = vunpack.c.l.b16 %v81
  %v162 = vunpack.c.l.b16 %v82
  %v163 = vunpack.c.l.b16 %v83
  %v164 = vunpack.c.l.b16 %v84
  %v165 = vunpack.c.l.b16 %v85
  %v166 = vunpack.c.l.b16 %v86
  %v167 = vunpack.c.l.b16 %v87
  %v168 = vpack.c.b16 %v153, %v152
  %v169 = vpack.c.b16 %v155, %v154
  %v170 = vpack.c.b16 %v157, %v156
  %v171 = vpack.c.b16 %v159, %v158
  %v172 = vpack.c.b16 %v161, %v160
  %v173 = vpack.c.b16 %v163, %v162
  %v174 = vpack.c.b16 %v165, %v164
  %v175 = vpack.c.b16 %v167, %v166
  %184 = vmatpush.bf16.msra.mxu0 %v175
  %185 = vmatpush.bf16.msra.mxu0 %v174
  %186 = vmatpush.bf16.msra.mxu0 %v173
  %187 = vmatpush.bf16.msra.mxu0 %v172
  %188 = vmatpush.bf16.msra.mxu0 %v171
  %189 = vmatpush.bf16.msra.mxu0 %v170
  %190 = vmatpush.bf16.msra.mxu0 %v169
  %191 = vmatpush.bf16.msra.mxu0 %v168
  %192 = vmatmul.bf16.gmra.mxu0 %v120
  %v193 = vpop.f32.mrf.mxu0
  %v194 = vadd.f32 0.0, %v193
  %v195 = vpop.f32.mrf.mxu0
  %v196 = vadd.f32 0.0, %v195
  %197 = vmatmul.bf16.gmra.mxu0 %v121
  %v198 = vpop.f32.mrf.mxu0
  %v199 = vadd.f32 0.0, %v198
  %v200 = vpop.f32.mrf.mxu0
  %v201 = vadd.f32 0.0, %v200
  %202 = vmatmul.bf16.gmra.mxu0 %v122
  %v203 = vpop.f32.mrf.mxu0
  %v204 = vadd.f32 0.0, %v203
  %v205 = vpop.f32.mrf.mxu0
  %v206 = vadd.f32 0.0, %v205
  %207 = vmatmul.bf16.gmra.mxu0 %v123
  %v208 = vpop.f32.mrf.mxu0
  %v209 = vadd.f32 0.0, %v208
  %v210 = vpop.f32.mrf.mxu0
  %v211 = vadd.f32 0.0, %v210
  %212 = vmatmul.bf16.gmra.mxu0 %v124
  %v213 = vpop.f32.mrf.mxu0
  %v214 = vadd.f32 0.0, %v213
  %v215 = vpop.f32.mrf.mxu0
  %v216 = vadd.f32 0.0, %v215
  %217 = vmatmul.bf16.gmra.mxu0 %v125
  %v218 = vpop.f32.mrf.mxu0
  %v219 = vadd.f32 0.0, %v218
  %v220 = vpop.f32.mrf.mxu0
  %v221 = vadd.f32 0.0, %v220
  %222 = vmatmul.bf16.gmra.mxu0 %v126
  %v223 = vpop.f32.mrf.mxu0
  %v224 = vadd.f32 0.0, %v223
  %v225 = vpop.f32.mrf.mxu0
  %v226 = vadd.f32 0.0, %v225
  %227 = vmatmul.bf16.gmra.mxu0 %v127
  %v228 = vpop.f32.mrf.mxu0
  %v229 = vadd.f32 0.0, %v228
  %v230 = vpop.f32.mrf.mxu0
  %v231 = vadd.f32 0.0, %v230
  %232 = vdwg.mxu0
  %v233 = vadd.f32 %v40, %v194
  %v234 = vadd.f32 %v41, %v196
  %v235 = vadd.f32 %v42, %v199
  %v236 = vadd.f32 %v43, %v201
  %v237 = vadd.f32 %v44, %v204
  %v238 = vadd.f32 %v45, %v206
  %v239 = vadd.f32 %v46, %v209
  %v240 = vadd.f32 %v47, %v211
  %v241 = vadd.f32 %v48, %v214
  %v242 = vadd.f32 %v49, %v216
  %v243 = vadd.f32 %v50, %v219
  %v244 = vadd.f32 %v51, %v221
  %v245 = vadd.f32 %v52, %v224
  %v246 = vadd.f32 %v53, %v226
  %v247 = vadd.f32 %v54, %v229
  %v248 = vadd.f32 %v55, %v231
  %249 = vst [vmem:[#allocation2] sm:$0xff] %v233
  %250 = vst [vmem:[#allocation2 + $0x8] sm:$0xff] %v234
  %251 = vst [vmem:[#allocation2 + $0x10] sm:$0xff] %v235
  %252 = vst [vmem:[#allocation2 + $0x18] sm:$0xff] %v236
  %253 = vst [vmem:[#allocation2 + $0x20] sm:$0xff] %v237
  %254 = vst [vmem:[#allocation2 + $0x28] sm:$0xff] %v238
  %255 = vst [vmem:[#allocation2 + $0x30] sm:$0xff] %v239
  %256 = vst [vmem:[#allocation2 + $0x38] sm:$0xff] %v240
  %257 = vst [vmem:[#allocation2 + $0x40] sm:$0xff] %v241
  %258 = vst [vmem:[#allocation2 + $0x48] sm:$0xff] %v242
  %259 = vst [vmem:[#allocation2 + $0x50] sm:$0xff] %v243
  %260 = vst [vmem:[#allocation2 + $0x58] sm:$0xff] %v244
  %261 = vst [vmem:[#allocation2 + $0x60] sm:$0xff] %v245
  %262 = vst [vmem:[#allocation2 + $0x68] sm:$0xff] %v246
  %263 = vst [vmem:[#allocation2 + $0x70] sm:$0xff] %v247
  %264 = vst [vmem:[#allocation2 + $0x78] sm:$0xff] %v248
  // Predicated region
  $region26: #{graph_auto_encoder_forward.3} parent=0 // pred_check
    %p265 = pneg %p20
  $region27: #{graph_auto_encoder_forward.3} parent=0 // pred_check_branch
    %267 = sbr.rel (%p265) target = $region29
  $region28: #{graph_auto_encoder_forward.3} parent=0 // pred_region
    %v268 = vld [vmem:[%s2] sm:$0xff]
    %v269 = vld [vmem:[%s2 + $0x8] sm:$0xff]
    %v270 = vld [vmem:[%s2 + $0x10] sm:$0xff]
    %v271 = vld [vmem:[%s2 + $0x18] sm:$0xff]
    %v272 = vld [vmem:[%s2 + $0x20] sm:$0xff]
    %v273 = vld [vmem:[%s2 + $0x28] sm:$0xff]
    %v274 = vld [vmem:[%s2 + $0x30] sm:$0xff]
    %v275 = vld [vmem:[%s2 + $0x38] sm:$0xff]
    %v276 = vld [vmem:[%s2 + $0x40] sm:$0xff]
    %v277 = vld [vmem:[%s2 + $0x48] sm:$0xff]
    %v278 = vld [vmem:[%s2 + $0x50] sm:$0xff]
    %v279 = vld [vmem:[%s2 + $0x58] sm:$0xff]
    %v280 = vld [vmem:[%s2 + $0x60] sm:$0xff]
    %v281 = vld [vmem:[%s2 + $0x68] sm:$0xff]
    %v282 = vld [vmem:[%s2 + $0x70] sm:$0xff]
    %v283 = vld [vmem:[%s2 + $0x78] sm:$0xff]
    %v284 = vld [vmem:[#allocation2] sm:$0xff]
    %v285 = vld [vmem:[#allocation2 + $0x8] sm:$0xff]
    %v286 = vld [vmem:[#allocation2 + $0x10] sm:$0xff]
    %v287 = vld [vmem:[#allocation2 + $0x18] sm:$0xff]
    %v288 = vld [vmem:[#allocation2 + $0x20] sm:$0xff]
    %v289 = vld [vmem:[#allocation2 + $0x28] sm:$0xff]
    %v290 = vld [vmem:[#allocation2 + $0x30] sm:$0xff]
    %v291 = vld [vmem:[#allocation2 + $0x38] sm:$0xff]
    %v292 = vld [vmem:[#allocation2 + $0x40] sm:$0xff]
    %v293 = vld [vmem:[#allocation2 + $0x48] sm:$0xff]
    %v294 = vld [vmem:[#allocation2 + $0x50] sm:$0xff]
    %v295 = vld [vmem:[#allocation2 + $0x58] sm:$0xff]
    %v296 = vld [vmem:[#allocation2 + $0x60] sm:$0xff]
    %v297 = vld [vmem:[#allocation2 + $0x68] sm:$0xff]
    %v298 = vld [vmem:[#allocation2 + $0x70] sm:$0xff]
    %v299 = vld [vmem:[#allocation2 + $0x78] sm:$0xff]
    %301 = vset.pattern.permute.xlu0 0
    %302 = vperm.xlu0 %301, %v268
    %v303 = vpop.permute.xlu0 %302
    %306 = vset.pattern.permute.xlu0 0
    %307 = vperm.xlu0 %306, %v269
    %v308 = vpop.permute.xlu0 %307
    %311 = vset.pattern.permute.xlu0 0
    %312 = vperm.xlu0 %311, %v270
    %v313 = vpop.permute.xlu0 %312
    %316 = vset.pattern.permute.xlu0 0
    %317 = vperm.xlu0 %316, %v271
    %v318 = vpop.permute.xlu0 %317
    %321 = vset.pattern.permute.xlu0 0
    %322 = vperm.xlu0 %321, %v272
    %v323 = vpop.permute.xlu0 %322
    %326 = vset.pattern.permute.xlu0 0
    %327 = vperm.xlu0 %326, %v273
    %v328 = vpop.permute.xlu0 %327
    %331 = vset.pattern.permute.xlu0 0
    %332 = vperm.xlu0 %331, %v274
    %v333 = vpop.permute.xlu0 %332
    %336 = vset.pattern.permute.xlu0 0
    %337 = vperm.xlu0 %336, %v275
    %v338 = vpop.permute.xlu0 %337
    %341 = vset.pattern.permute.xlu0 0
    %342 = vperm.xlu0 %341, %v276
    %v343 = vpop.permute.xlu0 %342
    %346 = vset.pattern.permute.xlu0 0
    %347 = vperm.xlu0 %346, %v277
    %v348 = vpop.permute.xlu0 %347
    %351 = vset.pattern.permute.xlu0 0
    %352 = vperm.xlu0 %351, %v278
    %v353 = vpop.permute.xlu0 %352
    %356 = vset.pattern.permute.xlu0 0
    %357 = vperm.xlu0 %356, %v279
    %v358 = vpop.permute.xlu0 %357
    %361 = vset.pattern.permute.xlu0 0
    %362 = vperm.xlu0 %361, %v280
    %v363 = vpop.permute.xlu0 %362
    %366 = vset.pattern.permute.xlu0 0
    %367 = vperm.xlu0 %366, %v281
    %v368 = vpop.permute.xlu0 %367
    %371 = vset.pattern.permute.xlu0 0
    %372 = vperm.xlu0 %371, %v282
    %v373 = vpop.permute.xlu0 %372
    %376 = vset.pattern.permute.xlu0 0
    %377 = vperm.xlu0 %376, %v283
    %v378 = vpop.permute.xlu0 %377
    %v380 = vmul.f32 %v303, %v284
    %v381 = vmul.f32 %v308, %v285
    %v382 = vmul.f32 %v313, %v286
    %v383 = vmul.f32 %v318, %v287
    %v384 = vmul.f32 %v323, %v288
    %v385 = vmul.f32 %v328, %v289
    %v386 = vmul.f32 %v333, %v290
    %v387 = vmul.f32 %v338, %v291
    %v388 = vmul.f32 %v343, %v292
    %v389 = vmul.f32 %v348, %v293
    %v390 = vmul.f32 %v353, %v294
    %v391 = vmul.f32 %v358, %v295
    %v392 = vmul.f32 %v363, %v296
    %v393 = vmul.f32 %v368, %v297
    %v394 = vmul.f32 %v373, %v298
    %v395 = vmul.f32 %v378, %v299
    %v396 = vld [vmem:[%s3] sm:$0xff]
    %v397 = vld [vmem:[%s3 + $0x8] sm:$0xff]
    %v398 = vld [vmem:[%s3 + $0x10] sm:$0xff]
    %v399 = vld [vmem:[%s3 + $0x18] sm:$0xff]
    %v400 = vld [vmem:[%s3 + $0x20] sm:$0xff]
    %v401 = vld [vmem:[%s3 + $0x28] sm:$0xff]
    %v402 = vld [vmem:[%s3 + $0x30] sm:$0xff]
    %v403 = vld [vmem:[%s3 + $0x38] sm:$0xff]
    %v404 = vld [vmem:[%s3 + $0x40] sm:$0xff]
    %v405 = vld [vmem:[%s3 + $0x48] sm:$0xff]
    %v406 = vld [vmem:[%s3 + $0x50] sm:$0xff]
    %v407 = vld [vmem:[%s3 + $0x58] sm:$0xff]
    %v408 = vld [vmem:[%s3 + $0x60] sm:$0xff]
    %v409 = vld [vmem:[%s3 + $0x68] sm:$0xff]
    %v410 = vld [vmem:[%s3 + $0x70] sm:$0xff]
    %v411 = vld [vmem:[%s3 + $0x78] sm:$0xff]
    %v412 = vld [vmem:[%s4] sm:$0x1]
    %v414 = vperm.slane %v412, 0
    %416 = vmatpush.msra.mxu0 %v411
    %417 = vmatpush.msra.mxu0 %v410
    %418 = vmatpush.msra.mxu0 %v409
    %419 = vmatpush.msra.mxu0 %v408
    %420 = vmatpush.msra.mxu0 %v407
    %421 = vmatpush.msra.mxu0 %v406
    %422 = vmatpush.msra.mxu0 %v405
    %423 = vmatpush.msra.mxu0 %v404
    %424 = vmatpush.msra.mxu0 %v403
    %425 = vmatpush.msra.mxu0 %v402
    %426 = vmatpush.msra.mxu0 %v401
    %427 = vmatpush.msra.mxu0 %v400
    %428 = vmatpush.msra.mxu0 %v399
    %429 = vmatpush.msra.mxu0 %v398
    %430 = vmatpush.msra.mxu0 %v397
    %431 = vmatpush.msra.mxu0 %v396
    %432 = vmatmul.f32.gmra.mxu0 %v380
    %v433 = vpop.f32.mrf.mxu0
    %v434 = vadd.f32 %v414, %v433
    %435 = vmatmul.f32.gmra.mxu0 %v381
    %v436 = vpop.f32.mrf.mxu0
    %v437 = vadd.f32 %v414, %v436
    %438 = vmatmul.f32.gmra.mxu0 %v382
    %v439 = vpop.f32.mrf.mxu0
    %v440 = vadd.f32 %v414, %v439
    %441 = vmatmul.f32.gmra.mxu0 %v383
    %v442 = vpop.f32.mrf.mxu0
    %v443 = vadd.f32 %v414, %v442
    %444 = vmatmul.f32.gmra.mxu0 %v384
    %v445 = vpop.f32.mrf.mxu0
    %v446 = vadd.f32 %v414, %v445
    %447 = vmatmul.f32.gmra.mxu0 %v385
    %v448 = vpop.f32.mrf.mxu0
    %v449 = vadd.f32 %v414, %v448
    %450 = vmatmul.f32.gmra.mxu0 %v386
    %v451 = vpop.f32.mrf.mxu0
    %v452 = vadd.f32 %v414, %v451
    %453 = vmatmul.f32.gmra.mxu0 %v387
    %v454 = vpop.f32.mrf.mxu0
    %v455 = vadd.f32 %v414, %v454
    %456 = vmatmul.f32.gmra.mxu0 %v388
    %v457 = vpop.f32.mrf.mxu0
    %v458 = vadd.f32 %v414, %v457
    %459 = vmatmul.f32.gmra.mxu0 %v389
    %v460 = vpop.f32.mrf.mxu0
    %v461 = vadd.f32 %v414, %v460
    %462 = vmatmul.f32.gmra.mxu0 %v390
    %v463 = vpop.f32.mrf.mxu0
    %v464 = vadd.f32 %v414, %v463
    %465 = vmatmul.f32.gmra.mxu0 %v391
    %v466 = vpop.f32.mrf.mxu0
    %v467 = vadd.f32 %v414, %v466
    %468 = vmatmul.f32.gmra.mxu0 %v392
    %v469 = vpop.f32.mrf.mxu0
    %v470 = vadd.f32 %v414, %v469
    %471 = vmatmul.f32.gmra.mxu0 %v393
    %v472 = vpop.f32.mrf.mxu0
    %v473 = vadd.f32 %v414, %v472
    %474 = vmatmul.f32.gmra.mxu0 %v394
    %v475 = vpop.f32.mrf.mxu0
    %v476 = vadd.f32 %v414, %v475
    %477 = vmatmul.f32.gmra.mxu0 %v395
    %v478 = vpop.f32.mrf.mxu0
    %v479 = vadd.f32 %v414, %v478
    %480 = vdwg.mxu0
    %v481 = vmax.f32 %v434, 0.0
    %v482 = vmax.f32 %v437, 0.0
    %v483 = vmax.f32 %v440, 0.0
    %v484 = vmax.f32 %v443, 0.0
    %v485 = vmax.f32 %v446, 0.0
    %v486 = vmax.f32 %v449, 0.0
    %v487 = vmax.f32 %v452, 0.0
    %v488 = vmax.f32 %v455, 0.0
    %v489 = vmax.f32 %v458, 0.0
    %v490 = vmax.f32 %v461, 0.0
    %v491 = vmax.f32 %v464, 0.0
    %v492 = vmax.f32 %v467, 0.0
    %v493 = vmax.f32 %v470, 0.0
    %v494 = vmax.f32 %v473, 0.0
    %v495 = vmax.f32 %v476, 0.0
    %v496 = vmax.f32 %v479, 0.0
    %v497 = vmul.f32 %v481, %v303
    %v498 = vmul.f32 %v482, %v308
    %v499 = vmul.f32 %v483, %v313
    %v500 = vmul.f32 %v484, %v318
    %v501 = vmul.f32 %v485, %v323
    %v502 = vmul.f32 %v486, %v328
    %v503 = vmul.f32 %v487, %v333
    %v504 = vmul.f32 %v488, %v338
    %v505 = vmul.f32 %v489, %v343
    %v506 = vmul.f32 %v490, %v348
    %v507 = vmul.f32 %v491, %v353
    %v508 = vmul.f32 %v492, %v358
    %v509 = vmul.f32 %v493, %v363
    %v510 = vmul.f32 %v494, %v368
    %v511 = vmul.f32 %v495, %v373
    %v512 = vmul.f32 %v496, %v378
    %v513 = vpack.c.bf16 %v497, %v497
    %v514 = vpack.c.bf16 %v498, %v498
    %v515 = vpack.c.bf16 %v499, %v499
    %v516 = vpack.c.bf16 %v500, %v500
    %v517 = vpack.c.bf16 %v501, %v501
    %v518 = vpack.c.bf16 %v502, %v502
    %v519 = vpack.c.bf16 %v503, %v503
    %v520 = vpack.c.bf16 %v504, %v504
    %v521 = vpack.c.bf16 %v505, %v505
    %v522 = vpack.c.bf16 %v506, %v506
    %v523 = vpack.c.bf16 %v507, %v507
    %v524 = vpack.c.bf16 %v508, %v508
    %v525 = vpack.c.bf16 %v509, %v509
    %v526 = vpack.c.bf16 %v510, %v510
    %v527 = vpack.c.bf16 %v511, %v511
    %v528 = vpack.c.bf16 %v512, %v512
    %529 = vst [vmem:[%s5] sm:$0xf] %v513
    %530 = vst [vmem:[%s5 + $0x4] sm:$0xf] %v514
    %531 = vst [vmem:[%s5 + $0x8] sm:$0xf] %v515
    %532 = vst [vmem:[%s5 + $0xc] sm:$0xf] %v516
    %533 = vst [vmem:[%s5 + $0x10] sm:$0xf] %v517
    %534 = vst [vmem:[%s5 + $0x14] sm:$0xf] %v518
    %535 = vst [vmem:[%s5 + $0x18] sm:$0xf] %v519
    %536 = vst [vmem:[%s5 + $0x1c] sm:$0xf] %v520
    %537 = vst [vmem:[%s5 + $0x20] sm:$0xf] %v521
    %538 = vst [vmem:[%s5 + $0x24] sm:$0xf] %v522
    %539 = vst [vmem:[%s5 + $0x28] sm:$0xf] %v523
    %540 = vst [vmem:[%s5 + $0x2c] sm:$0xf] %v524
    %541 = vst [vmem:[%s5 + $0x30] sm:$0xf] %v525
    %542 = vst [vmem:[%s5 + $0x34] sm:$0xf] %v526
    %543 = vst [vmem:[%s5 + $0x38] sm:$0xf] %v527
    %544 = vst [vmem:[%s5 + $0x3c] sm:$0xf] %v528
  $region29: #{graph_auto_encoder_forward.3} parent=0 // pred_fallthru
    _
  // Predicated region
  $region30: #{graph_auto_encoder_forward.3} parent=0 // pred_check
    _
  $region31: #{graph_auto_encoder_forward.3} parent=0 // pred_check_branch
    %546 = sbr.rel (0) target = $region33
  $region32: #{graph_auto_encoder_forward.3} parent=0 // pred_region
    _
  $region33: #{graph_auto_encoder_forward.3} parent=0 // pred_fallthru
    _
  // Predicated region
  $region34: #{graph_auto_encoder_forward.3} parent=0 // pred_check
    _
  $region35: #{graph_auto_encoder_forward.3} parent=0 // pred_check_branch
    %548 = sbr.rel (0) target = $region37
  $region36: #{graph_auto_encoder_forward.3} parent=0 // pred_region
    _
  $region37: #{graph_auto_encoder_forward.3} parent=0 // pred_fallthru
    _

// kernel: graph_auto_encoder_forward.4
$region0: #{graph_auto_encoder_forward.4}
  #allocation0 [shape = 'u32[]', space=smem, size = 0x4, offset = 0x4, fixed_abs, tag = 'smem constant byte address 0x4 - core index']
  #allocation1 [shape = 'u32[72,128]{1,0:T(1,128)}', space=vmem, size = 0x9000, scoped, tag = 'internal scratch']
  #allocation2 [shape = 'f32[128,128]{1,0:T(8,128)}', space=vmem, size = 0x10000, scoped, tag = 'scratch operand']
  %s0 = inlined_call_operand.vmem [shape: bf16[128,128], index: 0, kind: input, shape index: {}]
  %s1 = inlined_call_operand.vmem [shape: bf16[128,128], index: 1, kind: input, shape index: {}]
  %s2 = inlined_call_operand.vmem [shape: f32[128,1], index: 2, kind: input, shape index: {}]
  %s3 = inlined_call_operand.vmem [shape: f32[128,128], index: 3, kind: input, shape index: {}]
  %s4 = inlined_call_operand.vmem [shape: f32[1,128], index: 4, kind: input, shape index: {}]
  %s5 = inlined_call_operand.vmem [shape: f32[128,128], index: 5, kind: output, shape index: {}]
  %s6 = sld [smem:[#allocation0]]
  $region38: #{graph_auto_encoder_forward.4} parent=0
    _
  %s8 = ssub.s32 1, %s6
  %s9 = scalar_select 0, %s8, %s6
  // Predicated region
  $region2: #{graph_auto_encoder_forward.4} parent=0 // pred_check
    _
  $region3: #{graph_auto_encoder_forward.4} parent=0 // pred_check_branch
    %11 = sbr.rel (0) target = $region5
  $region4: #{graph_auto_encoder_forward.4} parent=0 // pred_region
    _
  $region5: #{graph_auto_encoder_forward.4} parent=0 // pred_fallthru
    _
  // Predicated region
  $region6: #{graph_auto_encoder_forward.4} parent=0 // pred_check
    _
  $region7: #{graph_auto_encoder_forward.4} parent=0 // pred_check_branch
    %13 = sbr.rel (0) target = $region9
  $region8: #{graph_auto_encoder_forward.4} parent=0 // pred_region
    _
  $region9: #{graph_auto_encoder_forward.4} parent=0 // pred_fallthru
    _
  // Predicated region
  $region10: #{graph_auto_encoder_forward.4} parent=0 // pred_check
    _
  $region11: #{graph_auto_encoder_forward.4} parent=0 // pred_check_branch
    %15 = sbr.rel (0) target = $region13
  $region12: #{graph_auto_encoder_forward.4} parent=0 // pred_region
    _
  $region13: #{graph_auto_encoder_forward.4} parent=0 // pred_fallthru
    _
  // Predicated region
  $region14: #{graph_auto_encoder_forward.4} parent=0 // pred_check
    _
  $region15: #{graph_auto_encoder_forward.4} parent=0 // pred_check_branch
    %17 = sbr.rel (0) target = $region17
  $region16: #{graph_auto_encoder_forward.4} parent=0 // pred_region
    _
  $region17: #{graph_auto_encoder_forward.4} parent=0 // pred_fallthru
    _
  // Predicated region
  $region18: #{graph_auto_encoder_forward.4} parent=0 // pred_check
    _
  $region19: #{graph_auto_encoder_forward.4} parent=0 // pred_check_branch
    %19 = sbr.rel (0) target = $region21
  $region20: #{graph_auto_encoder_forward.4} parent=0 // pred_region
    _
  $region21: #{graph_auto_encoder_forward.4} parent=0 // pred_fallthru
    _
  %p20 = scmp.eq.s32.totalorder 0, 0
  // Predicated region
  $region22: #{graph_auto_encoder_forward.4} parent=0 // pred_check
    %p21 = pneg %p20
  $region23: #{graph_auto_encoder_forward.4} parent=0 // pred_check_branch
    %23 = sbr.rel (%p21) target = $region25
  $region24: #{graph_auto_encoder_forward.4} parent=0 // pred_region
    %24 = vst [vmem:[#allocation2] sm:$0xff] 0.0
    %25 = vst [vmem:[#allocation2 + $0x8] sm:$0xff] 0.0
    %26 = vst [vmem:[#allocation2 + $0x10] sm:$0xff] 0.0
    %27 = vst [vmem:[#allocation2 + $0x18] sm:$0xff] 0.0
    %28 = vst [vmem:[#allocation2 + $0x20] sm:$0xff] 0.0
    %29 = vst [vmem:[#allocation2 + $0x28] sm:$0xff] 0.0
    %30 = vst [vmem:[#allocation2 + $0x30] sm:$0xff] 0.0
    %31 = vst [vmem:[#allocation2 + $0x38] sm:$0xff] 0.0
    %32 = vst [vmem:[#allocation2 + $0x40] sm:$0xff] 0.0
    %33 = vst [vmem:[#allocation2 + $0x48] sm:$0xff] 0.0
    %34 = vst [vmem:[#allocation2 + $0x50] sm:$0xff] 0.0
    %35 = vst [vmem:[#allocation2 + $0x58] sm:$0xff] 0.0
    %36 = vst [vmem:[#allocation2 + $0x60] sm:$0xff] 0.0
    %37 = vst [vmem:[#allocation2 + $0x68] sm:$0xff] 0.0
    %38 = vst [vmem:[#allocation2 + $0x70] sm:$0xff] 0.0
    %39 = vst [vmem:[#allocation2 + $0x78] sm:$0xff] 0.0
  $region25: #{graph_auto_encoder_forward.4} parent=0 // pred_fallthru
    _
  %v40 = vld [vmem:[#allocation2] sm:$0xff]
  %v41 = vld [vmem:[#allocation2 + $0x8] sm:$0xff]
  %v42 = vld [vmem:[#allocation2 + $0x10] sm:$0xff]
  %v43 = vld [vmem:[#allocation2 + $0x18] sm:$0xff]
  %v44 = vld [vmem:[#allocation2 + $0x20] sm:$0xff]
  %v45 = vld [vmem:[#allocation2 + $0x28] sm:$0xff]
  %v46 = vld [vmem:[#allocation2 + $0x30] sm:$0xff]
  %v47 = vld [vmem:[#allocation2 + $0x38] sm:$0xff]
  %v48 = vld [vmem:[#allocation2 + $0x40] sm:$0xff]
  %v49 = vld [vmem:[#allocation2 + $0x48] sm:$0xff]
  %v50 = vld [vmem:[#allocation2 + $0x50] sm:$0xff]
  %v51 = vld [vmem:[#allocation2 + $0x58] sm:$0xff]
  %v52 = vld [vmem:[#allocation2 + $0x60] sm:$0xff]
  %v53 = vld [vmem:[#allocation2 + $0x68] sm:$0xff]
  %v54 = vld [vmem:[#allocation2 + $0x70] sm:$0xff]
  %v55 = vld [vmem:[#allocation2 + $0x78] sm:$0xff]
  %v56 = vld [vmem:[%s0] sm:$0xf]
  %v57 = vld [vmem:[%s0 + $0x4] sm:$0xf]
  %v58 = vld [vmem:[%s0 + $0x8] sm:$0xf]
  %v59 = vld [vmem:[%s0 + $0xc] sm:$0xf]
  %v60 = vld [vmem:[%s0 + $0x10] sm:$0xf]
  %v61 = vld [vmem:[%s0 + $0x14] sm:$0xf]
  %v62 = vld [vmem:[%s0 + $0x18] sm:$0xf]
  %v63 = vld [vmem:[%s0 + $0x1c] sm:$0xf]
  %v64 = vld [vmem:[%s0 + $0x20] sm:$0xf]
  %v65 = vld [vmem:[%s0 + $0x24] sm:$0xf]
  %v66 = vld [vmem:[%s0 + $0x28] sm:$0xf]
  %v67 = vld [vmem:[%s0 + $0x2c] sm:$0xf]
  %v68 = vld [vmem:[%s0 + $0x30] sm:$0xf]
  %v69 = vld [vmem:[%s0 + $0x34] sm:$0xf]
  %v70 = vld [vmem:[%s0 + $0x38] sm:$0xf]
  %v71 = vld [vmem:[%s0 + $0x3c] sm:$0xf]
  %v72 = vld [vmem:[%s1] sm:$0xf]
  %v73 = vld [vmem:[%s1 + $0x4] sm:$0xf]
  %v74 = vld [vmem:[%s1 + $0x8] sm:$0xf]
  %v75 = vld [vmem:[%s1 + $0xc] sm:$0xf]
  %v76 = vld [vmem:[%s1 + $0x10] sm:$0xf]
  %v77 = vld [vmem:[%s1 + $0x14] sm:$0xf]
  %v78 = vld [vmem:[%s1 + $0x18] sm:$0xf]
  %v79 = vld [vmem:[%s1 + $0x1c] sm:$0xf]
  %v80 = vld [vmem:[%s1 + $0x20] sm:$0xf]
  %v81 = vld [vmem:[%s1 + $0x24] sm:$0xf]
  %v82 = vld [vmem:[%s1 + $0x28] sm:$0xf]
  %v83 = vld [vmem:[%s1 + $0x2c] sm:$0xf]
  %v84 = vld [vmem:[%s1 + $0x30] sm:$0xf]
  %v85 = vld [vmem:[%s1 + $0x34] sm:$0xf]
  %v86 = vld [vmem:[%s1 + $0x38] sm:$0xf]
  %v87 = vld [vmem:[%s1 + $0x3c] sm:$0xf]
  %v104 = vunpack.c.l.b16 %v56
  %v105 = vunpack.c.l.b16 %v57
  %v106 = vunpack.c.l.b16 %v58
  %v107 = vunpack.c.l.b16 %v59
  %v108 = vunpack.c.l.b16 %v60
  %v109 = vunpack.c.l.b16 %v61
  %v110 = vunpack.c.l.b16 %v62
  %v111 = vunpack.c.l.b16 %v63
  %v112 = vunpack.c.l.b16 %v64
  %v113 = vunpack.c.l.b16 %v65
  %v114 = vunpack.c.l.b16 %v66
  %v115 = vunpack.c.l.b16 %v67
  %v116 = vunpack.c.l.b16 %v68
  %v117 = vunpack.c.l.b16 %v69
  %v118 = vunpack.c.l.b16 %v70
  %v119 = vunpack.c.l.b16 %v71
  %v120 = vpack.c.b16 %v105, %v104
  %v121 = vpack.c.b16 %v107, %v106
  %v122 = vpack.c.b16 %v109, %v108
  %v123 = vpack.c.b16 %v111, %v110
  %v124 = vpack.c.b16 %v113, %v112
  %v125 = vpack.c.b16 %v115, %v114
  %v126 = vpack.c.b16 %v117, %v116
  %v127 = vpack.c.b16 %v119, %v118
  %v152 = vunpack.c.l.b16 %v72
  %v153 = vunpack.c.l.b16 %v73
  %v154 = vunpack.c.l.b16 %v74
  %v155 = vunpack.c.l.b16 %v75
  %v156 = vunpack.c.l.b16 %v76
  %v157 = vunpack.c.l.b16 %v77
  %v158 = vunpack.c.l.b16 %v78
  %v159 = vunpack.c.l.b16 %v79
  %v160 = vunpack.c.l.b16 %v80
  %v161 = vunpack.c.l.b16 %v81
  %v162 = vunpack.c.l.b16 %v82
  %v163 = vunpack.c.l.b16 %v83
  %v164 = vunpack.c.l.b16 %v84
  %v165 = vunpack.c.l.b16 %v85
  %v166 = vunpack.c.l.b16 %v86
  %v167 = vunpack.c.l.b16 %v87
  %v168 = vpack.c.b16 %v153, %v152
  %v169 = vpack.c.b16 %v155, %v154
  %v170 = vpack.c.b16 %v157, %v156
  %v171 = vpack.c.b16 %v159, %v158
  %v172 = vpack.c.b16 %v161, %v160
  %v173 = vpack.c.b16 %v163, %v162
  %v174 = vpack.c.b16 %v165, %v164
  %v175 = vpack.c.b16 %v167, %v166
  %184 = vmatpush.bf16.msra.mxu0 %v175
  %185 = vmatpush.bf16.msra.mxu0 %v174
  %186 = vmatpush.bf16.msra.mxu0 %v173
  %187 = vmatpush.bf16.msra.mxu0 %v172
  %188 = vmatpush.bf16.msra.mxu0 %v171
  %189 = vmatpush.bf16.msra.mxu0 %v170
  %190 = vmatpush.bf16.msra.mxu0 %v169
  %191 = vmatpush.bf16.msra.mxu0 %v168
  %192 = vmatmul.bf16.gmra.mxu0 %v120
  %v193 = vpop.f32.mrf.mxu0
  %v194 = vadd.f32 0.0, %v193
  %v195 = vpop.f32.mrf.mxu0
  %v196 = vadd.f32 0.0, %v195
  %197 = vmatmul.bf16.gmra.mxu0 %v121
  %v198 = vpop.f32.mrf.mxu0
  %v199 = vadd.f32 0.0, %v198
  %v200 = vpop.f32.mrf.mxu0
  %v201 = vadd.f32 0.0, %v200
  %202 = vmatmul.bf16.gmra.mxu0 %v122
  %v203 = vpop.f32.mrf.mxu0
  %v204 = vadd.f32 0.0, %v203
  %v205 = vpop.f32.mrf.mxu0
  %v206 = vadd.f32 0.0, %v205
  %207 = vmatmul.bf16.gmra.mxu0 %v123
  %v208 = vpop.f32.mrf.mxu0
  %v209 = vadd.f32 0.0, %v208
  %v210 = vpop.f32.mrf.mxu0
  %v211 = vadd.f32 0.0, %v210
  %212 = vmatmul.bf16.gmra.mxu0 %v124
  %v213 = vpop.f32.mrf.mxu0
  %v214 = vadd.f32 0.0, %v213
  %v215 = vpop.f32.mrf.mxu0
  %v216 = vadd.f32 0.0, %v215
  %217 = vmatmul.bf16.gmra.mxu0 %v125
  %v218 = vpop.f32.mrf.mxu0
  %v219 = vadd.f32 0.0, %v218
  %v220 = vpop.f32.mrf.mxu0
  %v221 = vadd.f32 0.0, %v220
  %222 = vmatmul.bf16.gmra.mxu0 %v126
  %v223 = vpop.f32.mrf.mxu0
  %v224 = vadd.f32 0.0, %v223
  %v225 = vpop.f32.mrf.mxu0
  %v226 = vadd.f32 0.0, %v225
  %227 = vmatmul.bf16.gmra.mxu0 %v127
  %v228 = vpop.f32.mrf.mxu0
  %v229 = vadd.f32 0.0, %v228
  %v230 = vpop.f32.mrf.mxu0
  %v231 = vadd.f32 0.0, %v230
  %232 = vdwg.mxu0
  %v233 = vadd.f32 %v40, %v194
  %v234 = vadd.f32 %v41, %v196
  %v235 = vadd.f32 %v42, %v199
  %v236 = vadd.f32 %v43, %v201
  %v237 = vadd.f32 %v44, %v204
  %v238 = vadd.f32 %v45, %v206
  %v239 = vadd.f32 %v46, %v209
  %v240 = vadd.f32 %v47, %v211
  %v241 = vadd.f32 %v48, %v214
  %v242 = vadd.f32 %v49, %v216
  %v243 = vadd.f32 %v50, %v219
  %v244 = vadd.f32 %v51, %v221
  %v245 = vadd.f32 %v52, %v224
  %v246 = vadd.f32 %v53, %v226
  %v247 = vadd.f32 %v54, %v229
  %v248 = vadd.f32 %v55, %v231
  %249 = vst [vmem:[#allocation2] sm:$0xff] %v233
  %250 = vst [vmem:[#allocation2 + $0x8] sm:$0xff] %v234
  %251 = vst [vmem:[#allocation2 + $0x10] sm:$0xff] %v235
  %252 = vst [vmem:[#allocation2 + $0x18] sm:$0xff] %v236
  %253 = vst [vmem:[#allocation2 + $0x20] sm:$0xff] %v237
  %254 = vst [vmem:[#allocation2 + $0x28] sm:$0xff] %v238
  %255 = vst [vmem:[#allocation2 + $0x30] sm:$0xff] %v239
  %256 = vst [vmem:[#allocation2 + $0x38] sm:$0xff] %v240
  %257 = vst [vmem:[#allocation2 + $0x40] sm:$0xff] %v241
  %258 = vst [vmem:[#allocation2 + $0x48] sm:$0xff] %v242
  %259 = vst [vmem:[#allocation2 + $0x50] sm:$0xff] %v243
  %260 = vst [vmem:[#allocation2 + $0x58] sm:$0xff] %v244
  %261 = vst [vmem:[#allocation2 + $0x60] sm:$0xff] %v245
  %262 = vst [vmem:[#allocation2 + $0x68] sm:$0xff] %v246
  %263 = vst [vmem:[#allocation2 + $0x70] sm:$0xff] %v247
  %264 = vst [vmem:[#allocation2 + $0x78] sm:$0xff] %v248
  // Predicated region
  $region26: #{graph_auto_encoder_forward.4} parent=0 // pred_check
    %p265 = pneg %p20
  $region27: #{graph_auto_encoder_forward.4} parent=0 // pred_check_branch
    %267 = sbr.rel (%p265) target = $region29
  $region28: #{graph_auto_encoder_forward.4} parent=0 // pred_region
    %v268 = vld [vmem:[%s2] sm:$0xff]
    %v269 = vld [vmem:[%s2 + $0x8] sm:$0xff]
    %v270 = vld [vmem:[%s2 + $0x10] sm:$0xff]
    %v271 = vld [vmem:[%s2 + $0x18] sm:$0xff]
    %v272 = vld [vmem:[%s2 + $0x20] sm:$0xff]
    %v273 = vld [vmem:[%s2 + $0x28] sm:$0xff]
    %v274 = vld [vmem:[%s2 + $0x30] sm:$0xff]
    %v275 = vld [vmem:[%s2 + $0x38] sm:$0xff]
    %v276 = vld [vmem:[%s2 + $0x40] sm:$0xff]
    %v277 = vld [vmem:[%s2 + $0x48] sm:$0xff]
    %v278 = vld [vmem:[%s2 + $0x50] sm:$0xff]
    %v279 = vld [vmem:[%s2 + $0x58] sm:$0xff]
    %v280 = vld [vmem:[%s2 + $0x60] sm:$0xff]
    %v281 = vld [vmem:[%s2 + $0x68] sm:$0xff]
    %v282 = vld [vmem:[%s2 + $0x70] sm:$0xff]
    %v283 = vld [vmem:[%s2 + $0x78] sm:$0xff]
    %v284 = vld [vmem:[#allocation2] sm:$0xff]
    %v285 = vld [vmem:[#allocation2 + $0x8] sm:$0xff]
    %v286 = vld [vmem:[#allocation2 + $0x10] sm:$0xff]
    %v287 = vld [vmem:[#allocation2 + $0x18] sm:$0xff]
    %v288 = vld [vmem:[#allocation2 + $0x20] sm:$0xff]
    %v289 = vld [vmem:[#allocation2 + $0x28] sm:$0xff]
    %v290 = vld [vmem:[#allocation2 + $0x30] sm:$0xff]
    %v291 = vld [vmem:[#allocation2 + $0x38] sm:$0xff]
    %v292 = vld [vmem:[#allocation2 + $0x40] sm:$0xff]
    %v293 = vld [vmem:[#allocation2 + $0x48] sm:$0xff]
    %v294 = vld [vmem:[#allocation2 + $0x50] sm:$0xff]
    %v295 = vld [vmem:[#allocation2 + $0x58] sm:$0xff]
    %v296 = vld [vmem:[#allocation2 + $0x60] sm:$0xff]
    %v297 = vld [vmem:[#allocation2 + $0x68] sm:$0xff]
    %v298 = vld [vmem:[#allocation2 + $0x70] sm:$0xff]
    %v299 = vld [vmem:[#allocation2 + $0x78] sm:$0xff]
    %301 = vset.pattern.permute.xlu0 0
    %302 = vperm.xlu0 %301, %v268
    %v303 = vpop.permute.xlu0 %302
    %306 = vset.pattern.permute.xlu0 0
    %307 = vperm.xlu0 %306, %v269
    %v308 = vpop.permute.xlu0 %307
    %311 = vset.pattern.permute.xlu0 0
    %312 = vperm.xlu0 %311, %v270
    %v313 = vpop.permute.xlu0 %312
    %316 = vset.pattern.permute.xlu0 0
    %317 = vperm.xlu0 %316, %v271
    %v318 = vpop.permute.xlu0 %317
    %321 = vset.pattern.permute.xlu0 0
    %322 = vperm.xlu0 %321, %v272
    %v323 = vpop.permute.xlu0 %322
    %326 = vset.pattern.permute.xlu0 0
    %327 = vperm.xlu0 %326, %v273
    %v328 = vpop.permute.xlu0 %327
    %331 = vset.pattern.permute.xlu0 0
    %332 = vperm.xlu0 %331, %v274
    %v333 = vpop.permute.xlu0 %332
    %336 = vset.pattern.permute.xlu0 0
    %337 = vperm.xlu0 %336, %v275
    %v338 = vpop.permute.xlu0 %337
    %341 = vset.pattern.permute.xlu0 0
    %342 = vperm.xlu0 %341, %v276
    %v343 = vpop.permute.xlu0 %342
    %346 = vset.pattern.permute.xlu0 0
    %347 = vperm.xlu0 %346, %v277
    %v348 = vpop.permute.xlu0 %347
    %351 = vset.pattern.permute.xlu0 0
    %352 = vperm.xlu0 %351, %v278
    %v353 = vpop.permute.xlu0 %352
    %356 = vset.pattern.permute.xlu0 0
    %357 = vperm.xlu0 %356, %v279
    %v358 = vpop.permute.xlu0 %357
    %361 = vset.pattern.permute.xlu0 0
    %362 = vperm.xlu0 %361, %v280
    %v363 = vpop.permute.xlu0 %362
    %366 = vset.pattern.permute.xlu0 0
    %367 = vperm.xlu0 %366, %v281
    %v368 = vpop.permute.xlu0 %367
    %371 = vset.pattern.permute.xlu0 0
    %372 = vperm.xlu0 %371, %v282
    %v373 = vpop.permute.xlu0 %372
    %376 = vset.pattern.permute.xlu0 0
    %377 = vperm.xlu0 %376, %v283
    %v378 = vpop.permute.xlu0 %377
    %v380 = vmul.f32 %v303, %v284
    %v381 = vmul.f32 %v308, %v285
    %v382 = vmul.f32 %v313, %v286
    %v383 = vmul.f32 %v318, %v287
    %v384 = vmul.f32 %v323, %v288
    %v385 = vmul.f32 %v328, %v289
    %v386 = vmul.f32 %v333, %v290
    %v387 = vmul.f32 %v338, %v291
    %v388 = vmul.f32 %v343, %v292
    %v389 = vmul.f32 %v348, %v293
    %v390 = vmul.f32 %v353, %v294
    %v391 = vmul.f32 %v358, %v295
    %v392 = vmul.f32 %v363, %v296
    %v393 = vmul.f32 %v368, %v297
    %v394 = vmul.f32 %v373, %v298
    %v395 = vmul.f32 %v378, %v299
    %v396 = vld [vmem:[%s3] sm:$0xff]
    %v397 = vld [vmem:[%s3 + $0x8] sm:$0xff]
    %v398 = vld [vmem:[%s3 + $0x10] sm:$0xff]
    %v399 = vld [vmem:[%s3 + $0x18] sm:$0xff]
    %v400 = vld [vmem:[%s3 + $0x20] sm:$0xff]
    %v401 = vld [vmem:[%s3 + $0x28] sm:$0xff]
    %v402 = vld [vmem:[%s3 + $0x30] sm:$0xff]
    %v403 = vld [vmem:[%s3 + $0x38] sm:$0xff]
    %v404 = vld [vmem:[%s3 + $0x40] sm:$0xff]
    %v405 = vld [vmem:[%s3 + $0x48] sm:$0xff]
    %v406 = vld [vmem:[%s3 + $0x50] sm:$0xff]
    %v407 = vld [vmem:[%s3 + $0x58] sm:$0xff]
    %v408 = vld [vmem:[%s3 + $0x60] sm:$0xff]
    %v409 = vld [vmem:[%s3 + $0x68] sm:$0xff]
    %v410 = vld [vmem:[%s3 + $0x70] sm:$0xff]
    %v411 = vld [vmem:[%s3 + $0x78] sm:$0xff]
    %v412 = vld [vmem:[%s4] sm:$0x1]
    %v414 = vperm.slane %v412, 0
    %416 = vmatpush.msra.mxu0 %v411
    %417 = vmatpush.msra.mxu0 %v410
    %418 = vmatpush.msra.mxu0 %v409
    %419 = vmatpush.msra.mxu0 %v408
    %420 = vmatpush.msra.mxu0 %v407
    %421 = vmatpush.msra.mxu0 %v406
    %422 = vmatpush.msra.mxu0 %v405
    %423 = vmatpush.msra.mxu0 %v404
    %424 = vmatpush.msra.mxu0 %v403
    %425 = vmatpush.msra.mxu0 %v402
    %426 = vmatpush.msra.mxu0 %v401
    %427 = vmatpush.msra.mxu0 %v400
    %428 = vmatpush.msra.mxu0 %v399
    %429 = vmatpush.msra.mxu0 %v398
    %430 = vmatpush.msra.mxu0 %v397
    %431 = vmatpush.msra.mxu0 %v396
    %432 = vmatmul.f32.gmra.mxu0 %v380
    %v433 = vpop.f32.mrf.mxu0
    %v434 = vadd.f32 %v414, %v433
    %435 = vmatmul.f32.gmra.mxu0 %v381
    %v436 = vpop.f32.mrf.mxu0
    %v437 = vadd.f32 %v414, %v436
    %438 = vmatmul.f32.gmra.mxu0 %v382
    %v439 = vpop.f32.mrf.mxu0
    %v440 = vadd.f32 %v414, %v439
    %441 = vmatmul.f32.gmra.mxu0 %v383
    %v442 = vpop.f32.mrf.mxu0
    %v443 = vadd.f32 %v414, %v442
    %444 = vmatmul.f32.gmra.mxu0 %v384
    %v445 = vpop.f32.mrf.mxu0
    %v446 = vadd.f32 %v414, %v445
    %447 = vmatmul.f32.gmra.mxu0 %v385
    %v448 = vpop.f32.mrf.mxu0
    %v449 = vadd.f32 %v414, %v448
    %450 = vmatmul.f32.gmra.mxu0 %v386
    %v451 = vpop.f32.mrf.mxu0
    %v452 = vadd.f32 %v414, %v451
    %453 = vmatmul.f32.gmra.mxu0 %v387
    %v454 = vpop.f32.mrf.mxu0
    %v455 = vadd.f32 %v414, %v454
    %456 = vmatmul.f32.gmra.mxu0 %v388
    %v457 = vpop.f32.mrf.mxu0
    %v458 = vadd.f32 %v414, %v457
    %459 = vmatmul.f32.gmra.mxu0 %v389
    %v460 = vpop.f32.mrf.mxu0
    %v461 = vadd.f32 %v414, %v460
    %462 = vmatmul.f32.gmra.mxu0 %v390
    %v463 = vpop.f32.mrf.mxu0
    %v464 = vadd.f32 %v414, %v463
    %465 = vmatmul.f32.gmra.mxu0 %v391
    %v466 = vpop.f32.mrf.mxu0
    %v467 = vadd.f32 %v414, %v466
    %468 = vmatmul.f32.gmra.mxu0 %v392
    %v469 = vpop.f32.mrf.mxu0
    %v470 = vadd.f32 %v414, %v469
    %471 = vmatmul.f32.gmra.mxu0 %v393
    %v472 = vpop.f32.mrf.mxu0
    %v473 = vadd.f32 %v414, %v472
    %474 = vmatmul.f32.gmra.mxu0 %v394
    %v475 = vpop.f32.mrf.mxu0
    %v476 = vadd.f32 %v414, %v475
    %477 = vmatmul.f32.gmra.mxu0 %v395
    %v478 = vpop.f32.mrf.mxu0
    %v479 = vadd.f32 %v414, %v478
    %480 = vdwg.mxu0
    %481 = vst [vmem:[%s5] sm:$0xff] %v434
    %482 = vst [vmem:[%s5 + $0x8] sm:$0xff] %v437
    %483 = vst [vmem:[%s5 + $0x10] sm:$0xff] %v440
    %484 = vst [vmem:[%s5 + $0x18] sm:$0xff] %v443
    %485 = vst [vmem:[%s5 + $0x20] sm:$0xff] %v446
    %486 = vst [vmem:[%s5 + $0x28] sm:$0xff] %v449
    %487 = vst [vmem:[%s5 + $0x30] sm:$0xff] %v452
    %488 = vst [vmem:[%s5 + $0x38] sm:$0xff] %v455
    %489 = vst [vmem:[%s5 + $0x40] sm:$0xff] %v458
    %490 = vst [vmem:[%s5 + $0x48] sm:$0xff] %v461
    %491 = vst [vmem:[%s5 + $0x50] sm:$0xff] %v464
    %492 = vst [vmem:[%s5 + $0x58] sm:$0xff] %v467
    %493 = vst [vmem:[%s5 + $0x60] sm:$0xff] %v470
    %494 = vst [vmem:[%s5 + $0x68] sm:$0xff] %v473
    %495 = vst [vmem:[%s5 + $0x70] sm:$0xff] %v476
    %496 = vst [vmem:[%s5 + $0x78] sm:$0xff] %v479
  $region29: #{graph_auto_encoder_forward.4} parent=0 // pred_fallthru
    _
  // Predicated region
  $region30: #{graph_auto_encoder_forward.4} parent=0 // pred_check
    _
  $region31: #{graph_auto_encoder_forward.4} parent=0 // pred_check_branch
    %498 = sbr.rel (0) target = $region33
  $region32: #{graph_auto_encoder_forward.4} parent=0 // pred_region
    _
  $region33: #{graph_auto_encoder_forward.4} parent=0 // pred_fallthru
    _
  // Predicated region
  $region34: #{graph_auto_encoder_forward.4} parent=0 // pred_check
    _
  $region35: #{graph_auto_encoder_forward.4} parent=0 // pred_check_branch
    %500 = sbr.rel (0) target = $region37
  $region36: #{graph_auto_encoder_forward.4} parent=0 // pred_region
    _
  $region37: #{graph_auto_encoder_forward.4} parent=0 // pred_fallthru
    _

// kernel: graph_auto_encoder_forward.5
$region0: #{graph_auto_encoder_forward.5}
  #allocation0 [shape = 'u32[]', space=smem, size = 0x4, offset = 0x4, fixed_abs, tag = 'smem constant byte address 0x4 - core index']
  #allocation1 [shape = 'u32[72,128]{1,0:T(1,128)}', space=vmem, size = 0x9000, scoped, tag = 'internal scratch']
  #allocation2 [shape = 'f32[1,128]{1,0:T(1,128)}', space=vmem, size = 0x200, scoped, tag = 'scratch operand']
  %s0 = inlined_call_operand.vmem [shape: f32[128,128], index: 0, kind: input, shape index: {}, may-alias: {0,1}]
  %s1 = inlined_call_operand.vmem [shape: f32[128,128], index: 1, kind: input, shape index: {}, may-alias: {0,1}]
  %s2 = inlined_call_operand.vmem [shape: f32[128,1], index: 2, kind: input, shape index: {}]
  %s3 = inlined_call_operand.vmem [shape: f32[1,128], index: 3, kind: input, shape index: {}]
  %s4 = inlined_call_operand.vmem [shape: f32[128,128], index: 4, kind: output, shape index: {}]
  %s5 = sld [smem:[#allocation0]]
  $region61: #{graph_auto_encoder_forward.5} parent=0
    _
  %s7 = ssub.s32 1, %s5
  %s8 = scalar_select 0, %s7, %s5
  loop: start=0, step=1, limit=4
  $region2: #{graph_auto_encoder_forward.5} parent=0 // loop_pre_header
    _
  $region3: #{graph_auto_encoder_forward.5} parent=0 // loop_header
    %s10 = sphi 0, %s14
    %p11 = scmp.ge.s32.totalorder %s10, 4
    %s17 = sphi 0, %s36
    %s18 = sphi 0, %s32
    %s19 = sphi 0, %s28
    %s20 = sphi 0, %s17
    %s21 = sphi 0, %s18
    %s22 = sphi 0, %s19
    %s23 = sphi 0, %s20
    %s24 = sphi 0, %s21
    %s25 = sphi 0, %s22
    %s39 = sphi 0, %s41
    %s42 = sphi 0, %s39
    %s43 = sphi 0, %s42
    %s59 = sphi 0, %s43
    %s65 = sphi 0, %s67
    %s68 = sphi 0, %s65
    %s69 = sphi 0, %s68
    %s85 = sphi 0, %s69
    %s91 = sphi 0, %s93
    %s94 = sphi 0, %s91
    %s95 = sphi 0, %s94
    %s111 = sphi 0, %s95
    %s117 = sphi 0, %s119
    %s120 = sphi 0, %s117
    %s121 = sphi 0, %s120
    %s137 = sphi 0, %s121
    %s149 = sphi 0, %s151
    %s152 = sphi 0, %s149
    %s153 = sphi 0, %s152
    %s169 = sphi 0, %s153
  $region4: #{graph_auto_encoder_forward.5} parent=0 // loop_header_branch
    %13 = sbr.rel (%p11) target = $region8
  $region5: #{graph_auto_encoder_forward.5} parent=0 // loop_body
    %s15 = ssub.s32 %s10, 1
    %s16 = ssub.s32 %s10, 2
    %s26 = sadd.s32 1, %s19
    %p27 = scmp.ge.s32.totalorder %s26, 1
    %s28 = scalar_select %p27, 0, %s26
    %s29 = sadd.s32 1, %s18
    %s30 = scalar_select %p27, %s29, %s18
    %p31 = scmp.ge.s32.totalorder %s30, 1
    %s32 = scalar_select %p31, 0, %s30
    %s33 = sadd.s32 1, %s17
    %s34 = scalar_select %p31, %s33, %s17
    %p35 = scmp.ge.s32.totalorder %s34, 2
    %s36 = scalar_select %p35, 0, %s34
    %s37 = ssub.s32 %s18, %s32
    %p38 = scmp.eq.s32.totalorder %s37, 0
    %s40 = sadd.s32 %s39, 1
    %s41 = scalar_select %p38, %s39, %s40
    %p44 = pneg %p38
    %p45 = scmp.eq.s32.totalorder %s10, 1
    %p46 = por %p44, %p45
    %p47 = scmp.ne.s32.totalorder %s39, %s42
    %p48 = scmp.eq.s32.totalorder %s10, 0
    %p49 = por %p47, %p48
    %p50 = scmp.ne.s32.totalorder %s39, %s42
    %p51 = scmp.eq.s32.totalorder %s15, 1
    %p52 = por %p50, %p51
    %p53 = scmp.ne.s32.totalorder %s42, %s43
    %p54 = scmp.eq.s32.totalorder %s15, 0
    %p55 = por %p53, %p54
    %p56 = scmp.ne.s32.totalorder %s42, %s43
    %p57 = scmp.eq.s32.totalorder %s16, 1
    %p58 = por %p56, %p57
    %p60 = scmp.ne.s32.totalorder %s43, %s59
    %p61 = scmp.eq.s32.totalorder %s16, 0
    %p62 = por %p60, %p61
    %s63 = ssub.s32 %s19, %s28
    %p64 = scmp.eq.s32.totalorder %s63, 0
    %s66 = sadd.s32 %s65, 1
    %s67 = scalar_select %p64, %s65, %s66
    %p70 = pneg %p64
    %p71 = scmp.eq.s32.totalorder %s10, 1
    %p72 = por %p70, %p71
    %p73 = scmp.ne.s32.totalorder %s65, %s68
    %p74 = scmp.eq.s32.totalorder %s10, 0
    %p75 = por %p73, %p74
    %p76 = scmp.ne.s32.totalorder %s65, %s68
    %p77 = scmp.eq.s32.totalorder %s15, 1
    %p78 = por %p76, %p77
    %p79 = scmp.ne.s32.totalorder %s68, %s69
    %p80 = scmp.eq.s32.totalorder %s15, 0
    %p81 = por %p79, %p80
    %p82 = scmp.ne.s32.totalorder %s68, %s69
    %p83 = scmp.eq.s32.totalorder %s16, 1
    %p84 = por %p82, %p83
    %p86 = scmp.ne.s32.totalorder %s69, %s85
    %p87 = scmp.eq.s32.totalorder %s16, 0
    %p88 = por %p86, %p87
    %s89 = ssub.s32 %s18, %s32
    %p90 = scmp.eq.s32.totalorder %s89, 0
    %s92 = sadd.s32 %s91, 1
    %s93 = scalar_select %p90, %s91, %s92
    %p96 = pneg %p90
    %p97 = scmp.eq.s32.totalorder %s10, 1
    %p98 = por %p96, %p97
    %p99 = scmp.ne.s32.totalorder %s91, %s94
    %p100 = scmp.eq.s32.totalorder %s10, 0
    %p101 = por %p99, %p100
    %p102 = scmp.ne.s32.totalorder %s91, %s94
    %p103 = scmp.eq.s32.totalorder %s15, 1
    %p104 = por %p102, %p103
    %p105 = scmp.ne.s32.totalorder %s94, %s95
    %p106 = scmp.eq.s32.totalorder %s15, 0
    %p107 = por %p105, %p106
    %p108 = scmp.ne.s32.totalorder %s94, %s95
    %p109 = scmp.eq.s32.totalorder %s16, 1
    %p110 = por %p108, %p109
    %p112 = scmp.ne.s32.totalorder %s95, %s111
    %p113 = scmp.eq.s32.totalorder %s16, 0
    %p114 = por %p112, %p113
    %s115 = ssub.s32 %s19, %s28
    %p116 = scmp.eq.s32.totalorder %s115, 0
    %s118 = sadd.s32 %s117, 1
    %s119 = scalar_select %p116, %s117, %s118
    %p122 = pneg %p116
    %p123 = scmp.eq.s32.totalorder %s10, 1
    %p124 = por %p122, %p123
    %p125 = scmp.ne.s32.totalorder %s117, %s120
    %p126 = scmp.eq.s32.totalorder %s10, 0
    %p127 = por %p125, %p126
    %p128 = scmp.ne.s32.totalorder %s117, %s120
    %p129 = scmp.eq.s32.totalorder %s15, 1
    %p130 = por %p128, %p129
    %p131 = scmp.ne.s32.totalorder %s120, %s121
    %p132 = scmp.eq.s32.totalorder %s15, 0
    %p133 = por %p131, %p132
    %p134 = scmp.ne.s32.totalorder %s120, %s121
    %p135 = scmp.eq.s32.totalorder %s16, 1
    %p136 = por %p134, %p135
    %p138 = scmp.ne.s32.totalorder %s121, %s137
    %p139 = scmp.eq.s32.totalorder %s16, 0
    %p140 = por %p138, %p139
    %s141 = smul.u32 %s18, %s17
    %s142 = smul.u32 %s19, %s17
    %s143 = smul.u32 %s32, %s36
    %s144 = smul.u32 %s28, %s36
    %s145 = ssub.s32 %s141, %s143
    %s146 = ssub.s32 %s142, %s144
    %s147 = sor.u32 %s145, %s146
    %p148 = scmp.eq.s32.totalorder %s147, 0
    %s150 = sadd.s32 %s149, 1
    %s151 = scalar_select %p148, %s149, %s150
    %p154 = pneg %p148
    %p155 = scmp.eq.s32.totalorder %s10, 1
    %p156 = por %p154, %p155
    %p157 = scmp.ne.s32.totalorder %s149, %s152
    %p158 = scmp.eq.s32.totalorder %s10, 0
    %p159 = por %p157, %p158
    %p160 = scmp.ne.s32.totalorder %s149, %s152
    %p161 = scmp.eq.s32.totalorder %s15, 1
    %p162 = por %p160, %p161
    %p163 = scmp.ne.s32.totalorder %s152, %s153
    %p164 = scmp.eq.s32.totalorder %s15, 0
    %p165 = por %p163, %p164
    %p166 = scmp.ne.s32.totalorder %s152, %s153
    %p167 = scmp.eq.s32.totalorder %s16, 1
    %p168 = por %p166, %p167
    %p170 = scmp.ne.s32.totalorder %s153, %s169
    %p171 = scmp.eq.s32.totalorder %s16, 0
    %p172 = por %p170, %p171
    %p173 = scmp.le.s32.totalorder 1, %s10
    %p174 = scmp.lt.s32.totalorder %s10, 3
    %p175 = pnand %p173, %p174
    %p176 = pneg %p175
    // Predicated region
    $region9: #{graph_auto_encoder_forward.5} parent=5 // pred_check
      _
    $region10: #{graph_auto_encoder_forward.5} parent=5 // pred_check_branch
      %178 = sbr.rel (%p175) target = $region12
    $region11: #{graph_auto_encoder_forward.5} parent=5 // pred_region
      %s179 = ssub.s32 %s10, 1
      // Predicated region
      $region13: #{graph_auto_encoder_forward.5} parent=11 // pred_check
        %p180 = pneg %p55
      $region14: #{graph_auto_encoder_forward.5} parent=11 // pred_check_branch
        %182 = sbr.rel (%p180) target = $region16
      $region15: #{graph_auto_encoder_forward.5} parent=11 // pred_region
        %s183 = smul.u32 16, %s21
        %p184 = scmp.lt.s32.totalorder %s183, 15
        %s185 = scalar_select %p184, %s183, 15
        %s186 = smul.addr %s185, 8
        %s187 = scalar_lea.vmem %s0, %s186
        %s188 = smul.u32 16, %s21
      $region16: #{graph_auto_encoder_forward.5} parent=11 // pred_fallthru
        _
      // Predicated region
      $region17: #{graph_auto_encoder_forward.5} parent=11 // pred_check
        %p189 = pneg %p81
      $region18: #{graph_auto_encoder_forward.5} parent=11 // pred_check_branch
        %191 = sbr.rel (%p189) target = $region20
      $region19: #{graph_auto_encoder_forward.5} parent=11 // pred_region
        %s192 = smul.u32 16, %s22
        %p193 = scmp.lt.s32.totalorder %s192, 15
        %s194 = scalar_select %p193, %s192, 15
        %s195 = smul.addr %s194, 8
        %s196 = scalar_lea.vmem %s1, %s195
        %s197 = smul.u32 16, %s22
      $region20: #{graph_auto_encoder_forward.5} parent=11 // pred_fallthru
        _
      // Predicated region
      $region21: #{graph_auto_encoder_forward.5} parent=11 // pred_check
        %p198 = pneg %p107
      $region22: #{graph_auto_encoder_forward.5} parent=11 // pred_check_branch
        %200 = sbr.rel (%p198) target = $region24
      $region23: #{graph_auto_encoder_forward.5} parent=11 // pred_region
        %s201 = smul.u32 16, %s21
        %p202 = scmp.lt.s32.totalorder %s201, 15
        %s203 = scalar_select %p202, %s201, 15
        %s204 = smul.addr %s203, 8
        %s205 = scalar_lea.vmem %s2, %s204
        %s206 = smul.u32 16, %s21
      $region24: #{graph_auto_encoder_forward.5} parent=11 // pred_fallthru
        _
      // Predicated region
      $region25: #{graph_auto_encoder_forward.5} parent=11 // pred_check
        %p207 = pneg %p133
      $region26: #{graph_auto_encoder_forward.5} parent=11 // pred_check_branch
        %209 = sbr.rel (%p207) target = $region28
      $region27: #{graph_auto_encoder_forward.5} parent=11 // pred_region
        %p210 = scmp.lt.s32.totalorder %s22, 0
        %s211 = scalar_select %p210, %s22, 0
        %s212 = scalar_lea.vmem %s3, %s211
      $region28: #{graph_auto_encoder_forward.5} parent=11 // pred_fallthru
        _
    $region12: #{graph_auto_encoder_forward.5} parent=5 // pred_fallthru
      _
    %p213 = scmp.lt.s32.totalorder %s10, 2
    // Predicated region
    $region29: #{graph_auto_encoder_forward.5} parent=5 // pred_check
      %p214 = pneg %p213
    $region30: #{graph_auto_encoder_forward.5} parent=5 // pred_check_branch
      %216 = sbr.rel (%p214) target = $region32
    $region31: #{graph_auto_encoder_forward.5} parent=5 // pred_region
      _
    $region32: #{graph_auto_encoder_forward.5} parent=5 // pred_fallthru
      _
    %p217 = scmp.le.s32.totalorder 1, %s10
    %p218 = scmp.lt.s32.totalorder %s10, 3
    %p219 = pnand %p217, %p218
    %p220 = pneg %p219
    // Predicated region
    $region33: #{graph_auto_encoder_forward.5} parent=5 // pred_check
      _
    $region34: #{graph_auto_encoder_forward.5} parent=5 // pred_check_branch
      %222 = sbr.rel (%p219) target = $region36
    $region35: #{graph_auto_encoder_forward.5} parent=5 // pred_region
      %s223 = ssub.s32 %s10, 1
      %s224 = smul.u32 16, %s21
      %p225 = scmp.lt.s32.totalorder %s224, 15
      %s226 = scalar_select %p225, %s224, 15
      %s227 = smul.addr %s226, 8
      %s228 = scalar_lea.vmem %s0, %s227
      %p229 = pneg %p55
      %p230 = pneg %p52
      %s231 = smul.u32 16, %s22
      %p232 = scmp.lt.s32.totalorder %s231, 15
      %s233 = scalar_select %p232, %s231, 15
      %s234 = smul.addr %s233, 8
      %s235 = scalar_lea.vmem %s1, %s234
      %p236 = pneg %p81
      %p237 = pneg %p78
      %s238 = smul.u32 16, %s21
      %p239 = scmp.lt.s32.totalorder %s238, 15
      %s240 = scalar_select %p239, %s238, 15
      %s241 = smul.addr %s240, 8
      %s242 = scalar_lea.vmem %s2, %s241
      %p243 = pneg %p107
      %p244 = pneg %p104
      %p245 = scmp.lt.s32.totalorder %s22, 0
      %s246 = scalar_select %p245, %s22, 0
      %s247 = scalar_lea.vmem %s3, %s246
      %p248 = pneg %p133
      %p249 = pneg %p130
      %p250 = pneg %p165
      %p251 = pneg %p162
      %s252 = smul.u32 %s21, %s20
      %s253 = smul.u32 %s22, %s20
      %s254 = smul.u32 16, %s252
      %p255 = scmp.lt.s32.totalorder %s254, 15
      %s256 = scalar_select %p255, %s254, 15
      %p257 = scmp.lt.s32.totalorder %s253, 0
      %s258 = scalar_select %p257, %s253, 0
      %s259 = sadd.s32 %s258, %s256
      %s260 = smul.addr %s259, 8
      %s261 = scalar_lea.vmem %s4, %s260
      %s262 = smul.u32 16, %s21
      %p263 = scmp.lt.s32.totalorder %s262, 15
      %s264 = scalar_select %p263, %s262, 15
      %s265 = smul.addr %s264, 8
      %s266 = scalar_lea.vmem %s0, %s265
      %s267 = smul.u32 16, %s21
      %s268 = smul.u32 16, %s22
      %p269 = scmp.lt.s32.totalorder %s268, 15
      %s270 = scalar_select %p269, %s268, 15
      %s271 = smul.addr %s270, 8
      %s272 = scalar_lea.vmem %s1, %s271
      %s273 = smul.u32 16, %s22
      %s274 = smul.u32 16, %s21
      %p275 = scmp.lt.s32.totalorder %s274, 15
      %s276 = scalar_select %p275, %s274, 15
      %s277 = smul.addr %s276, 8
      %s278 = scalar_lea.vmem %s2, %s277
      %s279 = smul.u32 16, %s21
      %p280 = scmp.lt.s32.totalorder %s22, 0
      %s281 = scalar_select %p280, %s22, 0
      %s282 = scalar_lea.vmem %s3, %s281
      %s283 = smul.u32 %s21, %s20
      %s284 = smul.u32 %s22, %s20
      %s285 = smul.u32 16, %s283
      %p286 = scmp.lt.s32.totalorder %s285, 15
      %s287 = scalar_select %p286, %s285, 15
      %p288 = scmp.lt.s32.totalorder %s284, 0
      %s289 = scalar_select %p288, %s284, 0
      %s290 = sadd.s32 %s289, %s287
      %s291 = smul.addr %s290, 8
      %s292 = scalar_lea.vmem %s4, %s291
      %s293 = smul.u32 %s21, %s20
      %s294 = smul.u32 %s22, %s20
      %s295 = smul.u32 16, %s293
      %v296 = vld [vmem:[%s266] sm:$0xff]
      %v297 = vld [vmem:[%s266 + $0x8] sm:$0xff]
      %v298 = vld [vmem:[%s266 + $0x10] sm:$0xff]
      %v299 = vld [vmem:[%s266 + $0x18] sm:$0xff]
      %v300 = vld [vmem:[%s266 + $0x20] sm:$0xff]
      %v301 = vld [vmem:[%s266 + $0x28] sm:$0xff]
      %v302 = vld [vmem:[%s266 + $0x30] sm:$0xff]
      %v303 = vld [vmem:[%s266 + $0x38] sm:$0xff]
      %v304 = vld [vmem:[%s266 + $0x40] sm:$0xff]
      %v305 = vld [vmem:[%s266 + $0x48] sm:$0xff]
      %v306 = vld [vmem:[%s266 + $0x50] sm:$0xff]
      %v307 = vld [vmem:[%s266 + $0x58] sm:$0xff]
      %v308 = vld [vmem:[%s266 + $0x60] sm:$0xff]
      %v309 = vld [vmem:[%s266 + $0x68] sm:$0xff]
      %v310 = vld [vmem:[%s266 + $0x70] sm:$0xff]
      %v311 = vld [vmem:[%s266 + $0x78] sm:$0xff]
      %v312 = vld [vmem:[%s272] sm:$0xff]
      %v313 = vld [vmem:[%s272 + $0x8] sm:$0xff]
      %v314 = vld [vmem:[%s272 + $0x10] sm:$0xff]
      %v315 = vld [vmem:[%s272 + $0x18] sm:$0xff]
      %v316 = vld [vmem:[%s272 + $0x20] sm:$0xff]
      %v317 = vld [vmem:[%s272 + $0x28] sm:$0xff]
      %v318 = vld [vmem:[%s272 + $0x30] sm:$0xff]
      %v319 = vld [vmem:[%s272 + $0x38] sm:$0xff]
      %v320 = vld [vmem:[%s272 + $0x40] sm:$0xff]
      %v321 = vld [vmem:[%s272 + $0x48] sm:$0xff]
      %v322 = vld [vmem:[%s272 + $0x50] sm:$0xff]
      %v323 = vld [vmem:[%s272 + $0x58] sm:$0xff]
      %v324 = vld [vmem:[%s272 + $0x60] sm:$0xff]
      %v325 = vld [vmem:[%s272 + $0x68] sm:$0xff]
      %v326 = vld [vmem:[%s272 + $0x70] sm:$0xff]
      %v327 = vld [vmem:[%s272 + $0x78] sm:$0xff]
      %328 = vmatpush.xpose.msra.mxu0 %v327
      %329 = vmatpush.xpose.msra.mxu0 %v326
      %330 = vmatpush.xpose.msra.mxu0 %v325
      %331 = vmatpush.xpose.msra.mxu0 %v324
      %332 = vmatpush.xpose.msra.mxu0 %v323
      %333 = vmatpush.xpose.msra.mxu0 %v322
      %334 = vmatpush.xpose.msra.mxu0 %v321
      %335 = vmatpush.xpose.msra.mxu0 %v320
      %336 = vmatpush.xpose.msra.mxu0 %v319
      %337 = vmatpush.xpose.msra.mxu0 %v318
      %338 = vmatpush.xpose.msra.mxu0 %v317
      %339 = vmatpush.xpose.msra.mxu0 %v316
      %340 = vmatpush.xpose.msra.mxu0 %v315
      %341 = vmatpush.xpose.msra.mxu0 %v314
      %342 = vmatpush.xpose.msra.mxu0 %v313
      %343 = vmatpush.xpose.msra.mxu0 %v312
      %344 = vmatmul.f32.gmra.mxu0 %v296
      %v345 = vpop.f32.mrf.mxu0
      %v346 = vadd.f32 0.0, %v345
      %347 = vmatmul.f32.gmra.mxu0 %v297
      %v348 = vpop.f32.mrf.mxu0
      %v349 = vadd.f32 0.0, %v348
      %350 = vmatmul.f32.gmra.mxu0 %v298
      %v351 = vpop.f32.mrf.mxu0
      %v352 = vadd.f32 0.0, %v351
      %353 = vmatmul.f32.gmra.mxu0 %v299
      %v354 = vpop.f32.mrf.mxu0
      %v355 = vadd.f32 0.0, %v354
      %356 = vmatmul.f32.gmra.mxu0 %v300
      %v357 = vpop.f32.mrf.mxu0
      %v358 = vadd.f32 0.0, %v357
      %359 = vmatmul.f32.gmra.mxu0 %v301
      %v360 = vpop.f32.mrf.mxu0
      %v361 = vadd.f32 0.0, %v360
      %362 = vmatmul.f32.gmra.mxu0 %v302
      %v363 = vpop.f32.mrf.mxu0
      %v364 = vadd.f32 0.0, %v363
      %365 = vmatmul.f32.gmra.mxu0 %v303
      %v366 = vpop.f32.mrf.mxu0
      %v367 = vadd.f32 0.0, %v366
      %368 = vmatmul.f32.gmra.mxu0 %v304
      %v369 = vpop.f32.mrf.mxu0
      %v370 = vadd.f32 0.0, %v369
      %371 = vmatmul.f32.gmra.mxu0 %v305
      %v372 = vpop.f32.mrf.mxu0
      %v373 = vadd.f32 0.0, %v372
      %374 = vmatmul.f32.gmra.mxu0 %v306
      %v375 = vpop.f32.mrf.mxu0
      %v376 = vadd.f32 0.0, %v375
      %377 = vmatmul.f32.gmra.mxu0 %v307
      %v378 = vpop.f32.mrf.mxu0
      %v379 = vadd.f32 0.0, %v378
      %380 = vmatmul.f32.gmra.mxu0 %v308
      %v381 = vpop.f32.mrf.mxu0
      %v382 = vadd.f32 0.0, %v381
      %383 = vmatmul.f32.gmra.mxu0 %v309
      %v384 = vpop.f32.mrf.mxu0
      %v385 = vadd.f32 0.0, %v384
      %386 = vmatmul.f32.gmra.mxu0 %v310
      %v387 = vpop.f32.mrf.mxu0
      %v388 = vadd.f32 0.0, %v387
      %389 = vmatmul.f32.gmra.mxu0 %v311
      %v390 = vpop.f32.mrf.mxu0
      %v391 = vadd.f32 0.0, %v390
      %392 = vdwg.mxu0
      %v393 = vld [vmem:[%s278] sm:$0xff]
      %v394 = vld [vmem:[%s278 + $0x8] sm:$0xff]
      %v395 = vld [vmem:[%s278 + $0x10] sm:$0xff]
      %v396 = vld [vmem:[%s278 + $0x18] sm:$0xff]
      %v397 = vld [vmem:[%s278 + $0x20] sm:$0xff]
      %v398 = vld [vmem:[%s278 + $0x28] sm:$0xff]
      %v399 = vld [vmem:[%s278 + $0x30] sm:$0xff]
      %v400 = vld [vmem:[%s278 + $0x38] sm:$0xff]
      %v401 = vld [vmem:[%s278 + $0x40] sm:$0xff]
      %v402 = vld [vmem:[%s278 + $0x48] sm:$0xff]
      %v403 = vld [vmem:[%s278 + $0x50] sm:$0xff]
      %v404 = vld [vmem:[%s278 + $0x58] sm:$0xff]
      %v405 = vld [vmem:[%s278 + $0x60] sm:$0xff]
      %v406 = vld [vmem:[%s278 + $0x68] sm:$0xff]
      %v407 = vld [vmem:[%s278 + $0x70] sm:$0xff]
      %v408 = vld [vmem:[%s278 + $0x78] sm:$0xff]
      %v409 = vld [vmem:[%s282] sm:$0x1]
      %411 = vset.pattern.permute.xlu0 0
      %412 = vperm.xlu0 %411, %v393
      %v413 = vpop.permute.xlu0 %412
      %416 = vset.pattern.permute.xlu0 0
      %417 = vperm.xlu0 %416, %v394
      %v418 = vpop.permute.xlu0 %417
      %421 = vset.pattern.permute.xlu0 0
      %422 = vperm.xlu0 %421, %v395
      %v423 = vpop.permute.xlu0 %422
      %426 = vset.pattern.permute.xlu0 0
      %427 = vperm.xlu0 %426, %v396
      %v428 = vpop.permute.xlu0 %427
      %431 = vset.pattern.permute.xlu0 0
      %432 = vperm.xlu0 %431, %v397
      %v433 = vpop.permute.xlu0 %432
      %436 = vset.pattern.permute.xlu0 0
      %437 = vperm.xlu0 %436, %v398
      %v438 = vpop.permute.xlu0 %437
      %441 = vset.pattern.permute.xlu0 0
      %442 = vperm.xlu0 %441, %v399
      %v443 = vpop.permute.xlu0 %442
      %446 = vset.pattern.permute.xlu0 0
      %447 = vperm.xlu0 %446, %v400
      %v448 = vpop.permute.xlu0 %447
      %451 = vset.pattern.permute.xlu0 0
      %452 = vperm.xlu0 %451, %v401
      %v453 = vpop.permute.xlu0 %452
      %456 = vset.pattern.permute.xlu0 0
      %457 = vperm.xlu0 %456, %v402
      %v458 = vpop.permute.xlu0 %457
      %461 = vset.pattern.permute.xlu0 0
      %462 = vperm.xlu0 %461, %v403
      %v463 = vpop.permute.xlu0 %462
      %466 = vset.pattern.permute.xlu0 0
      %467 = vperm.xlu0 %466, %v404
      %v468 = vpop.permute.xlu0 %467
      %471 = vset.pattern.permute.xlu0 0
      %472 = vperm.xlu0 %471, %v405
      %v473 = vpop.permute.xlu0 %472
      %476 = vset.pattern.permute.xlu0 0
      %477 = vperm.xlu0 %476, %v406
      %v478 = vpop.permute.xlu0 %477
      %481 = vset.pattern.permute.xlu0 0
      %482 = vperm.xlu0 %481, %v407
      %v483 = vpop.permute.xlu0 %482
      %486 = vset.pattern.permute.xlu0 0
      %487 = vperm.xlu0 %486, %v408
      %v488 = vpop.permute.xlu0 %487
      %v491 = vperm.slane %v409, 0
      %v493 = vadd.f32 %v413, %v491
      %v494 = vadd.f32 %v418, %v491
      %v495 = vadd.f32 %v423, %v491
      %v496 = vadd.f32 %v428, %v491
      %v497 = vadd.f32 %v433, %v491
      %v498 = vadd.f32 %v438, %v491
      %v499 = vadd.f32 %v443, %v491
      %v500 = vadd.f32 %v448, %v491
      %v501 = vadd.f32 %v453, %v491
      %v502 = vadd.f32 %v458, %v491
      %v503 = vadd.f32 %v463, %v491
      %v504 = vadd.f32 %v468, %v491
      %v505 = vadd.f32 %v473, %v491
      %v506 = vadd.f32 %v478, %v491
      %v507 = vadd.f32 %v483, %v491
      %v508 = vadd.f32 %v488, %v491
      %v509 = vmul.f32 %v346, 2.0
      %v510 = vmul.f32 %v349, 2.0
      %v511 = vmul.f32 %v352, 2.0
      %v512 = vmul.f32 %v355, 2.0
      %v513 = vmul.f32 %v358, 2.0
      %v514 = vmul.f32 %v361, 2.0
      %v515 = vmul.f32 %v364, 2.0
      %v516 = vmul.f32 %v367, 2.0
      %v517 = vmul.f32 %v370, 2.0
      %v518 = vmul.f32 %v373, 2.0
      %v519 = vmul.f32 %v376, 2.0
      %v520 = vmul.f32 %v379, 2.0
      %v521 = vmul.f32 %v382, 2.0
      %v522 = vmul.f32 %v385, 2.0
      %v523 = vmul.f32 %v388, 2.0
      %v524 = vmul.f32 %v391, 2.0
      %v525 = vsub.f32 %v493, %v509
      %v526 = vsub.f32 %v494, %v510
      %v527 = vsub.f32 %v495, %v511
      %v528 = vsub.f32 %v496, %v512
      %v529 = vsub.f32 %v497, %v513
      %v530 = vsub.f32 %v498, %v514
      %v531 = vsub.f32 %v499, %v515
      %v532 = vsub.f32 %v500, %v516
      %v533 = vsub.f32 %v501, %v517
      %v534 = vsub.f32 %v502, %v518
      %v535 = vsub.f32 %v503, %v519
      %v536 = vsub.f32 %v504, %v520
      %v537 = vsub.f32 %v505, %v521
      %v538 = vsub.f32 %v506, %v522
      %v539 = vsub.f32 %v507, %v523
      %v540 = vsub.f32 %v508, %v524
      %v541 = vmax.f32 %v525, 0.0
      %v542 = vmax.f32 %v526, 0.0
      %v543 = vmax.f32 %v527, 0.0
      %v544 = vmax.f32 %v528, 0.0
      %v545 = vmax.f32 %v529, 0.0
      %v546 = vmax.f32 %v530, 0.0
      %v547 = vmax.f32 %v531, 0.0
      %v548 = vmax.f32 %v532, 0.0
      %v549 = vmax.f32 %v533, 0.0
      %v550 = vmax.f32 %v534, 0.0
      %v551 = vmax.f32 %v535, 0.0
      %v552 = vmax.f32 %v536, 0.0
      %v553 = vmax.f32 %v537, 0.0
      %v554 = vmax.f32 %v538, 0.0
      %v555 = vmax.f32 %v539, 0.0
      %v556 = vmax.f32 %v540, 0.0
      %v557 = vrsqrt.pop %v541
      %v558 = vmul.f32 %v557, %v541
      %v559 = vmul.f32 %v558, %v557
      %v560 = vmul.f32 0.5, %v559
      %v561 = vsub.f32 1.5, %v560
      %v562 = vmul.f32 %v557, %v561
      %v563 = vmul.f32 %v541, %v562
      %vm564 = vcmp.eq.f32.partialorder %v541, inf
      %v565 = vsel %vm564, %v541, %v563
      %vm566 = vcmp.eq.f32.partialorder %v541, 0.0
      %v567 = vand.u32 %v541, 2147483648
      %v568 = vsel %vm566, %v567, %v565
      %v569 = vrsqrt.pop %v542
      %v570 = vmul.f32 %v569, %v542
      %v571 = vmul.f32 %v570, %v569
      %v572 = vmul.f32 0.5, %v571
      %v573 = vsub.f32 1.5, %v572
      %v574 = vmul.f32 %v569, %v573
      %v575 = vmul.f32 %v542, %v574
      %vm576 = vcmp.eq.f32.partialorder %v542, inf
      %v577 = vsel %vm576, %v542, %v575
      %vm578 = vcmp.eq.f32.partialorder %v542, 0.0
      %v579 = vand.u32 %v542, 2147483648
      %v580 = vsel %vm578, %v579, %v577
      %v581 = vrsqrt.pop %v543
      %v582 = vmul.f32 %v581, %v543
      %v583 = vmul.f32 %v582, %v581
      %v584 = vmul.f32 0.5, %v583
      %v585 = vsub.f32 1.5, %v584
      %v586 = vmul.f32 %v581, %v585
      %v587 = vmul.f32 %v543, %v586
      %vm588 = vcmp.eq.f32.partialorder %v543, inf
      %v589 = vsel %vm588, %v543, %v587
      %vm590 = vcmp.eq.f32.partialorder %v543, 0.0
      %v591 = vand.u32 %v543, 2147483648
      %v592 = vsel %vm590, %v591, %v589
      %v593 = vrsqrt.pop %v544
      %v594 = vmul.f32 %v593, %v544
      %v595 = vmul.f32 %v594, %v593
      %v596 = vmul.f32 0.5, %v595
      %v597 = vsub.f32 1.5, %v596
      %v598 = vmul.f32 %v593, %v597
      %v599 = vmul.f32 %v544, %v598
      %vm600 = vcmp.eq.f32.partialorder %v544, inf
      %v601 = vsel %vm600, %v544, %v599
      %vm602 = vcmp.eq.f32.partialorder %v544, 0.0
      %v603 = vand.u32 %v544, 2147483648
      %v604 = vsel %vm602, %v603, %v601
      %v605 = vrsqrt.pop %v545
      %v606 = vmul.f32 %v605, %v545
      %v607 = vmul.f32 %v606, %v605
      %v608 = vmul.f32 0.5, %v607
      %v609 = vsub.f32 1.5, %v608
      %v610 = vmul.f32 %v605, %v609
      %v611 = vmul.f32 %v545, %v610
      %vm612 = vcmp.eq.f32.partialorder %v545, inf
      %v613 = vsel %vm612, %v545, %v611
      %vm614 = vcmp.eq.f32.partialorder %v545, 0.0
      %v615 = vand.u32 %v545, 2147483648
      %v616 = vsel %vm614, %v615, %v613
      %v617 = vrsqrt.pop %v546
      %v618 = vmul.f32 %v617, %v546
      %v619 = vmul.f32 %v618, %v617
      %v620 = vmul.f32 0.5, %v619
      %v621 = vsub.f32 1.5, %v620
      %v622 = vmul.f32 %v617, %v621
      %v623 = vmul.f32 %v546, %v622
      %vm624 = vcmp.eq.f32.partialorder %v546, inf
      %v625 = vsel %vm624, %v546, %v623
      %vm626 = vcmp.eq.f32.partialorder %v546, 0.0
      %v627 = vand.u32 %v546, 2147483648
      %v628 = vsel %vm626, %v627, %v625
      %v629 = vrsqrt.pop %v547
      %v630 = vmul.f32 %v629, %v547
      %v631 = vmul.f32 %v630, %v629
      %v632 = vmul.f32 0.5, %v631
      %v633 = vsub.f32 1.5, %v632
      %v634 = vmul.f32 %v629, %v633
      %v635 = vmul.f32 %v547, %v634
      %vm636 = vcmp.eq.f32.partialorder %v547, inf
      %v637 = vsel %vm636, %v547, %v635
      %vm638 = vcmp.eq.f32.partialorder %v547, 0.0
      %v639 = vand.u32 %v547, 2147483648
      %v640 = vsel %vm638, %v639, %v637
      %v641 = vrsqrt.pop %v548
      %v642 = vmul.f32 %v641, %v548
      %v643 = vmul.f32 %v642, %v641
      %v644 = vmul.f32 0.5, %v643
      %v645 = vsub.f32 1.5, %v644
      %v646 = vmul.f32 %v641, %v645
      %v647 = vmul.f32 %v548, %v646
      %vm648 = vcmp.eq.f32.partialorder %v548, inf
      %v649 = vsel %vm648, %v548, %v647
      %vm650 = vcmp.eq.f32.partialorder %v548, 0.0
      %v651 = vand.u32 %v548, 2147483648
      %v652 = vsel %vm650, %v651, %v649
      %v653 = vrsqrt.pop %v549
      %v654 = vmul.f32 %v653, %v549
      %v655 = vmul.f32 %v654, %v653
      %v656 = vmul.f32 0.5, %v655
      %v657 = vsub.f32 1.5, %v656
      %v658 = vmul.f32 %v653, %v657
      %v659 = vmul.f32 %v549, %v658
      %vm660 = vcmp.eq.f32.partialorder %v549, inf
      %v661 = vsel %vm660, %v549, %v659
      %vm662 = vcmp.eq.f32.partialorder %v549, 0.0
      %v663 = vand.u32 %v549, 2147483648
      %v664 = vsel %vm662, %v663, %v661
      %v665 = vrsqrt.pop %v550
      %v666 = vmul.f32 %v665, %v550
      %v667 = vmul.f32 %v666, %v665
      %v668 = vmul.f32 0.5, %v667
      %v669 = vsub.f32 1.5, %v668
      %v670 = vmul.f32 %v665, %v669
      %v671 = vmul.f32 %v550, %v670
      %vm672 = vcmp.eq.f32.partialorder %v550, inf
      %v673 = vsel %vm672, %v550, %v671
      %vm674 = vcmp.eq.f32.partialorder %v550, 0.0
      %v675 = vand.u32 %v550, 2147483648
      %v676 = vsel %vm674, %v675, %v673
      %v677 = vrsqrt.pop %v551
      %v678 = vmul.f32 %v677, %v551
      %v679 = vmul.f32 %v678, %v677
      %v680 = vmul.f32 0.5, %v679
      %v681 = vsub.f32 1.5, %v680
      %v682 = vmul.f32 %v677, %v681
      %v683 = vmul.f32 %v551, %v682
      %vm684 = vcmp.eq.f32.partialorder %v551, inf
      %v685 = vsel %vm684, %v551, %v683
      %vm686 = vcmp.eq.f32.partialorder %v551, 0.0
      %v687 = vand.u32 %v551, 2147483648
      %v688 = vsel %vm686, %v687, %v685
      %v689 = vrsqrt.pop %v552
      %v690 = vmul.f32 %v689, %v552
      %v691 = vmul.f32 %v690, %v689
      %v692 = vmul.f32 0.5, %v691
      %v693 = vsub.f32 1.5, %v692
      %v694 = vmul.f32 %v689, %v693
      %v695 = vmul.f32 %v552, %v694
      %vm696 = vcmp.eq.f32.partialorder %v552, inf
      %v697 = vsel %vm696, %v552, %v695
      %vm698 = vcmp.eq.f32.partialorder %v552, 0.0
      %v699 = vand.u32 %v552, 2147483648
      %v700 = vsel %vm698, %v699, %v697
      %v701 = vrsqrt.pop %v553
      %v702 = vmul.f32 %v701, %v553
      %v703 = vmul.f32 %v702, %v701
      %v704 = vmul.f32 0.5, %v703
      %v705 = vsub.f32 1.5, %v704
      %v706 = vmul.f32 %v701, %v705
      %v707 = vmul.f32 %v553, %v706
      %vm708 = vcmp.eq.f32.partialorder %v553, inf
      %v709 = vsel %vm708, %v553, %v707
      %vm710 = vcmp.eq.f32.partialorder %v553, 0.0
      %v711 = vand.u32 %v553, 2147483648
      %v712 = vsel %vm710, %v711, %v709
      %v713 = vrsqrt.pop %v554
      %v714 = vmul.f32 %v713, %v554
      %v715 = vmul.f32 %v714, %v713
      %v716 = vmul.f32 0.5, %v715
      %v717 = vsub.f32 1.5, %v716
      %v718 = vmul.f32 %v713, %v717
      %v719 = vmul.f32 %v554, %v718
      %vm720 = vcmp.eq.f32.partialorder %v554, inf
      %v721 = vsel %vm720, %v554, %v719
      %vm722 = vcmp.eq.f32.partialorder %v554, 0.0
      %v723 = vand.u32 %v554, 2147483648
      %v724 = vsel %vm722, %v723, %v721
      %v725 = vrsqrt.pop %v555
      %v726 = vmul.f32 %v725, %v555
      %v727 = vmul.f32 %v726, %v725
      %v728 = vmul.f32 0.5, %v727
      %v729 = vsub.f32 1.5, %v728
      %v730 = vmul.f32 %v725, %v729
      %v731 = vmul.f32 %v555, %v730
      %vm732 = vcmp.eq.f32.partialorder %v555, inf
      %v733 = vsel %vm732, %v555, %v731
      %vm734 = vcmp.eq.f32.partialorder %v555, 0.0
      %v735 = vand.u32 %v555, 2147483648
      %v736 = vsel %vm734, %v735, %v733
      %v737 = vrsqrt.pop %v556
      %v738 = vmul.f32 %v737, %v556
      %v739 = vmul.f32 %v738, %v737
      %v740 = vmul.f32 0.5, %v739
      %v741 = vsub.f32 1.5, %v740
      %v742 = vmul.f32 %v737, %v741
      %v743 = vmul.f32 %v556, %v742
      %vm744 = vcmp.eq.f32.partialorder %v556, inf
      %v745 = vsel %vm744, %v556, %v743
      %vm746 = vcmp.eq.f32.partialorder %v556, 0.0
      %v747 = vand.u32 %v556, 2147483648
      %v748 = vsel %vm746, %v747, %v745
      %p749 = scmp.eq.s32.totalorder %s20, 0
      %p750 = scmp.eq.s32.totalorder %s21, 0
      %p751 = scmp.eq.s32.totalorder %s22, 0
      %p752 = pnand %p750, %p751
      %p753 = pneg %p752
      %p754 = pnand %p749, %p753
      %p755 = pneg %p754
      // Predicated region
      $region37: #{graph_auto_encoder_forward.5} parent=35 // pred_check
        _
      $region38: #{graph_auto_encoder_forward.5} parent=35 // pred_check_branch
        %757 = sbr.rel (%p754) target = $region40
      $region39: #{graph_auto_encoder_forward.5} parent=35 // pred_region
        %758 = vst [vmem:[#allocation2] sm:$0x1] 0.0
      $region40: #{graph_auto_encoder_forward.5} parent=35 // pred_fallthru
        _
      // Predicated region
      $region41: #{graph_auto_encoder_forward.5} parent=35 // pred_check
        %p759 = pneg %p749
      $region42: #{graph_auto_encoder_forward.5} parent=35 // pred_check_branch
        %761 = sbr.rel (%p759) target = $region44
      $region43: #{graph_auto_encoder_forward.5} parent=35 // pred_region
        %s762 = smul.u32 %s21, 128
        %v763 = vlaneseq
        %v764 = vshrl.u32 %v763, 7
        %v765 = vadd.s32 %v764, 8
        %v766 = vadd.s32 %v764, 16
        %v767 = vadd.s32 %v764, 24
        %v768 = vadd.s32 %v764, 32
        %v769 = vadd.s32 %v764, 40
        %v770 = vadd.s32 %v764, 48
        %v771 = vadd.s32 %v764, 56
        %v772 = vadd.s32 %v764, 64
        %v773 = vadd.s32 %v764, 72
        %v774 = vadd.s32 %v764, 80
        %v775 = vadd.s32 %v764, 88
        %v776 = vadd.s32 %v764, 96
        %v777 = vadd.s32 %v764, 104
        %v778 = vadd.s32 %v764, 112
        %v779 = vadd.s32 %v764, 120
        %v780 = vstv %s762
        %v781 = vadd.s32 %v780, %v764
        %v782 = vadd.s32 %v780, %v765
        %v783 = vadd.s32 %v780, %v766
        %v784 = vadd.s32 %v780, %v767
        %v785 = vadd.s32 %v780, %v768
        %v786 = vadd.s32 %v780, %v769
        %v787 = vadd.s32 %v780, %v770
        %v788 = vadd.s32 %v780, %v771
        %v789 = vadd.s32 %v780, %v772
        %v790 = vadd.s32 %v780, %v773
        %v791 = vadd.s32 %v780, %v774
        %v792 = vadd.s32 %v780, %v775
        %v793 = vadd.s32 %v780, %v776
        %v794 = vadd.s32 %v780, %v777
        %v795 = vadd.s32 %v780, %v778
        %v796 = vadd.s32 %v780, %v779
        %s797 = smul.u32 %s22, 128
        %v798 = vlaneseq
        %v799 = vand.u32 %v798, 127
        %v800 = vstv %s797
        %v801 = vadd.s32 %v800, %v799
        %vm802 = vcmp.lt.s32.totalorder %v781, 16
        %vm803 = vcmp.lt.s32.totalorder %v782, 16
        %vm804 = vcmp.lt.s32.totalorder %v783, 16
        %vm805 = vcmp.lt.s32.totalorder %v784, 16
        %vm806 = vcmp.lt.s32.totalorder %v785, 16
        %vm807 = vcmp.lt.s32.totalorder %v786, 16
        %vm808 = vcmp.lt.s32.totalorder %v787, 16
        %vm809 = vcmp.lt.s32.totalorder %v788, 16
        %vm810 = vcmp.lt.s32.totalorder %v789, 16
        %vm811 = vcmp.lt.s32.totalorder %v790, 16
        %vm812 = vcmp.lt.s32.totalorder %v791, 16
        %vm813 = vcmp.lt.s32.totalorder %v792, 16
        %vm814 = vcmp.lt.s32.totalorder %v793, 16
        %vm815 = vcmp.lt.s32.totalorder %v794, 16
        %vm816 = vcmp.lt.s32.totalorder %v795, 16
        %vm817 = vcmp.lt.s32.totalorder %v796, 16
        %vm818 = vcmp.lt.s32.totalorder %v801, 16
        %vm819 = vmand %vm802, %vm818
        %vm820 = vmand %vm803, %vm818
        %vm821 = vmand %vm804, %vm818
        %vm822 = vmand %vm805, %vm818
        %vm823 = vmand %vm806, %vm818
        %vm824 = vmand %vm807, %vm818
        %vm825 = vmand %vm808, %vm818
        %vm826 = vmand %vm809, %vm818
        %vm827 = vmand %vm810, %vm818
        %vm828 = vmand %vm811, %vm818
        %vm829 = vmand %vm812, %vm818
        %vm830 = vmand %vm813, %vm818
        %vm831 = vmand %vm814, %vm818
        %vm832 = vmand %vm815, %vm818
        %vm833 = vmand %vm816, %vm818
        %vm834 = vmand %vm817, %vm818
        %v835 = vsel %vm819, %v568, 0.0
        %v836 = vsel %vm820, %v580, 0.0
        %v837 = vsel %vm821, %v592, 0.0
        %v838 = vsel %vm822, %v604, 0.0
        %v839 = vsel %vm823, %v616, 0.0
        %v840 = vsel %vm824, %v628, 0.0
        %v841 = vsel %vm825, %v640, 0.0
        %v842 = vsel %vm826, %v652, 0.0
        %v843 = vsel %vm827, %v664, 0.0
        %v844 = vsel %vm828, %v676, 0.0
        %v845 = vsel %vm829, %v688, 0.0
        %v846 = vsel %vm830, %v700, 0.0
        %v847 = vsel %vm831, %v712, 0.0
        %v848 = vsel %vm832, %v724, 0.0
        %v849 = vsel %vm833, %v736, 0.0
        %v850 = vsel %vm834, %v748, 0.0
        %v851 = vld [vmem:[#allocation2] sm:$0x1]
        %v852 = vmax.f32 %v835, %v839
        %v853 = vmax.f32 %v836, %v840
        %v854 = vmax.f32 %v837, %v841
        %v855 = vmax.f32 %v838, %v842
        %v856 = vmax.f32 %v852, %v843
        %v857 = vmax.f32 %v853, %v844
        %v858 = vmax.f32 %v854, %v845
        %v859 = vmax.f32 %v855, %v846
        %v860 = vmax.f32 %v856, %v847
        %v861 = vmax.f32 %v857, %v848
        %v862 = vmax.f32 %v858, %v849
        %v863 = vmax.f32 %v859, %v850
        %v864 = vmax.f32 %v860, %v861
        %v865 = vmax.f32 %v862, %v863
        %v866 = vmax.f32 %v864, %v865
        %v867 = vrot.slane %v866, 4
        %v868 = vmax.f32 %v866, %v867
        %v869 = vrot.slane %v868, 2
        %v870 = vmax.f32 %v868, %v869
        %v871 = vrot.slane %v870, 1
        %v872 = vmax.f32 %v870, %v871
        %v873 = vmax.f32 %v851, %v872
        %874 = vst [vmem:[#allocation2] sm:$0x1] %v873
      $region44: #{graph_auto_encoder_forward.5} parent=35 // pred_fallthru
        _
      %p875 = scmp.eq.s32.totalorder %s20, 1
      // Predicated region
      $region45: #{graph_auto_encoder_forward.5} parent=35 // pred_check
        %p876 = pneg %p875
      $region46: #{graph_auto_encoder_forward.5} parent=35 // pred_check_branch
        %878 = sbr.rel (%p876) target = $region48
      $region47: #{graph_auto_encoder_forward.5} parent=35 // pred_region
        %v879 = vld [vmem:[#allocation2] sm:$0x1]
        %vm880 = vcmask 1040384
        %v881 = vsel %vm880, %v879, -inf
        %882 = vmax.xlane.f32.xlu0 %v881
        %v883 = vpop.xlane.xlu0 %882
        %v884 = vrot.slane %v883, 4
        %v885 = vmax.f32 %v883, %v884
        %v886 = vrot.slane %v885, 2
        %v887 = vmax.f32 %v885, %v886
        %v888 = vrot.slane %v887, 1
        %v889 = vmax.f32 %v887, %v888
        %s890 = vtos %v889
        %p891 = scmp.gt.f32.partialorder %s890, 0.0
        %v892 = vstv %s890
        %v893 = vrcp.pop %v892
        %v894 = vmul.f32 %v892, %v893
        %v895 = vsub.f32 1.0, %v894
        %v896 = vmul.f32 %v893, %v895
        %v897 = vadd.f32 %v893, %v896
        %vm898 = vweird.f32 %v892
        %vm899 = vweird.f32 %v893
        %vm900 = vmor %vm898, %vm899
        %v901 = vsel %vm900, %v893, %v897
        %v902 = vand.u32 2147483647, %v892
        %vm903 = vcmp.eq.f32.partialorder %v902, 8.507059e+37
        %v904 = vand.u32 %v892, 2147483648
        %v905 = vor.u32 1.1754944e-38, %v904
        %v906 = vsel %vm903, %v905, %v901
        %s907 = vtos %v906
        %s908 = scalar_select %p891, %s907, 1.0
        %v909 = vstv %s908
        %v910 = vmul.f32 %v568, %v909
        %v911 = vmul.f32 %v580, %v909
        %v912 = vmul.f32 %v592, %v909
        %v913 = vmul.f32 %v604, %v909
        %v914 = vmul.f32 %v616, %v909
        %v915 = vmul.f32 %v628, %v909
        %v916 = vmul.f32 %v640, %v909
        %v917 = vmul.f32 %v652, %v909
        %v918 = vmul.f32 %v664, %v909
        %v919 = vmul.f32 %v676, %v909
        %v920 = vmul.f32 %v688, %v909
        %v921 = vmul.f32 %v700, %v909
        %v922 = vmul.f32 %v712, %v909
        %v923 = vmul.f32 %v724, %v909
        %v924 = vmul.f32 %v736, %v909
        %v925 = vmul.f32 %v748, %v909
        %v926 = vsub.f32 1.0, %v910
        %v927 = vsub.f32 1.0, %v911
        %v928 = vsub.f32 1.0, %v912
        %v929 = vsub.f32 1.0, %v913
        %v930 = vsub.f32 1.0, %v914
        %v931 = vsub.f32 1.0, %v915
        %v932 = vsub.f32 1.0, %v916
        %v933 = vsub.f32 1.0, %v917
        %v934 = vsub.f32 1.0, %v918
        %v935 = vsub.f32 1.0, %v919
        %v936 = vsub.f32 1.0, %v920
        %v937 = vsub.f32 1.0, %v921
        %v938 = vsub.f32 1.0, %v922
        %v939 = vsub.f32 1.0, %v923
        %v940 = vsub.f32 1.0, %v924
        %v941 = vsub.f32 1.0, %v925
        %942 = vst [vmem:[%s292] sm:$0xff] %v926
        %943 = vst [vmem:[%s292 + $0x8] sm:$0xff] %v927
        %944 = vst [vmem:[%s292 + $0x10] sm:$0xff] %v928
        %945 = vst [vmem:[%s292 + $0x18] sm:$0xff] %v929
        %946 = vst [vmem:[%s292 + $0x20] sm:$0xff] %v930
        %947 = vst [vmem:[%s292 + $0x28] sm:$0xff] %v931
        %948 = vst [vmem:[%s292 + $0x30] sm:$0xff] %v932
        %949 = vst [vmem:[%s292 + $0x38] sm:$0xff] %v933
        %950 = vst [vmem:[%s292 + $0x40] sm:$0xff] %v934
        %951 = vst [vmem:[%s292 + $0x48] sm:$0xff] %v935
        %952 = vst [vmem:[%s292 + $0x50] sm:$0xff] %v936
        %953 = vst [vmem:[%s292 + $0x58] sm:$0xff] %v937
        %954 = vst [vmem:[%s292 + $0x60] sm:$0xff] %v938
        %955 = vst [vmem:[%s292 + $0x68] sm:$0xff] %v939
        %956 = vst [vmem:[%s292 + $0x70] sm:$0xff] %v940
        %957 = vst [vmem:[%s292 + $0x78] sm:$0xff] %v941
      $region48: #{graph_auto_encoder_forward.5} parent=35 // pred_fallthru
        _
      %s958 = smul.u32 %s21, %s20
      %s959 = smul.u32 %s22, %s20
      %s960 = smul.u32 16, %s958
      %p961 = scmp.lt.s32.totalorder %s960, 15
      %s962 = scalar_select %p961, %s960, 15
      %p963 = scmp.lt.s32.totalorder %s959, 0
      %s964 = scalar_select %p963, %s959, 0
      %s965 = sadd.s32 %s964, %s962
      %s966 = smul.addr %s965, 8
      %s967 = scalar_lea.vmem %s4, %s966
      // Predicated region
      $region49: #{graph_auto_encoder_forward.5} parent=35 // pred_check
        %p968 = pneg %p162
      $region50: #{graph_auto_encoder_forward.5} parent=35 // pred_check_branch
        %970 = sbr.rel (%p968) target = $region52
      $region51: #{graph_auto_encoder_forward.5} parent=35 // pred_region
        %s971 = smul.u32 %s21, %s20
        %s972 = smul.u32 %s22, %s20
        %s973 = smul.u32 16, %s971
      $region52: #{graph_auto_encoder_forward.5} parent=35 // pred_fallthru
        _
    $region36: #{graph_auto_encoder_forward.5} parent=5 // pred_fallthru
      _
    %p974 = scmp.le.s32.totalorder 2, %s10
    // Predicated region
    $region53: #{graph_auto_encoder_forward.5} parent=5 // pred_check
      %p975 = pneg %p974
    $region54: #{graph_auto_encoder_forward.5} parent=5 // pred_check_branch
      %977 = sbr.rel (%p975) target = $region56
    $region55: #{graph_auto_encoder_forward.5} parent=5 // pred_region
      %s978 = ssub.s32 %s10, 2
      // Predicated region
      $region57: #{graph_auto_encoder_forward.5} parent=55 // pred_check
        %p979 = pneg %p168
      $region58: #{graph_auto_encoder_forward.5} parent=55 // pred_check_branch
        %981 = sbr.rel (%p979) target = $region60
      $region59: #{graph_auto_encoder_forward.5} parent=55 // pred_region
        %s982 = smul.u32 %s24, %s23
        %s983 = smul.u32 %s25, %s23
        %s984 = smul.u32 16, %s982
        %p985 = scmp.lt.s32.totalorder %s984, 15
        %s986 = scalar_select %p985, %s984, 15
        %p987 = scmp.lt.s32.totalorder %s983, 0
        %s988 = scalar_select %p987, %s983, 0
        %s989 = sadd.s32 %s988, %s986
        %s990 = smul.addr %s989, 8
        %s991 = scalar_lea.vmem %s4, %s990
      $region60: #{graph_auto_encoder_forward.5} parent=55 // pred_fallthru
        _
    $region56: #{graph_auto_encoder_forward.5} parent=5 // pred_fallthru
      _
  $region6: #{graph_auto_encoder_forward.5} parent=0 // loop_footer
    %s14 = sadd.s32 1, %s10
  $region7: #{graph_auto_encoder_forward.5} parent=0 // loop_footer_branch
    %9 = sbr.rel target = $region3
  $region8: #{graph_auto_encoder_forward.5} parent=0 // loop_exit
    _

</llo_original>
